<compile_context>
chip_gen: v7x
topology: tpu7x:2x2x1
jax: 0.10.0
libtpu: 0.0.40
codegen_flags: <defaults>
</compile_context>

<pallas_src>
import jax
import jax.numpy as jnp
from jax.experimental import pallas as pl
from jax.experimental.pallas import tpu as pltpu

HIDDEN = 200
HIDDEN_PAD = 256          # 2 x 128 lanes: clean MXU tiles, unmasked vregs
IMG_H = 28
IMG_W = 28
OUT = IMG_H * IMG_W       # 784 = 6*128 + 16 : written directly (no col padding)
MAX_TM = 512              # batch tile cap (footprint << 32 MiB VMEM limit)


def _round_up(x, m):
    return ((x + m - 1) // m) * m


def _pad2(a, rows, cols):
    r, c = a.shape
    return jnp.pad(a, ((0, rows - r), (0, cols - c)))


def _choose_tm(batch):
    """Pick the batch tile: multiple of 16 (bf16 packing), waste-aware, and
    capped at ~B/2 so v7x's two TensorCores both get at least one tile."""
    if batch <= 32:
        return max(16, _round_up(batch, 16))
    cap = min(MAX_TM, _round_up((batch + 1) // 2, 16))   # >= 2 grid tiles
    best_tm, best_waste = None, None
    for base in (512, 256, 128):
        tm = min(base, cap)
        waste = _round_up(batch, tm) - batch
        if (best_waste is None or waste < best_waste
                or (waste == best_waste and tm > best_tm)):
            best_tm, best_waste = tm, waste
    return best_tm


def _decoder_kernel(x_ref,
                    w1_ref, b1_ref,
                    w2_ref, b2_ref,
                    w3_ref, b3_ref,
                    w4_ref, b4_ref,
                    o_ref):
    # Layer 1: (TM, 128) @ (128, 256) -> +bias -> ReLU     (bf16 MXU, f32 acc)
    x = x_ref[...].astype(jnp.bfloat16)
    h = jnp.dot(x, w1_ref[...], preferred_element_type=jnp.float32) + b1_ref[...]
    h = jnp.maximum(h, 0.0).astype(jnp.bfloat16)

    # Layer 2: (TM, 256) @ (256, 256) -> +bias -> ReLU
    h = jnp.dot(h, w2_ref[...], preferred_element_type=jnp.float32) + b2_ref[...]
    h = jnp.maximum(h, 0.0).astype(jnp.bfloat16)

    # Layer 3: (TM, 256) @ (256, 256) -> +bias -> ReLU
    h = jnp.dot(h, w3_ref[...], preferred_element_type=jnp.float32) + b3_ref[...]
    h = jnp.maximum(h, 0.0).astype(jnp.bfloat16)

    # Layer 4: (TM, 256) @ (256, 784) -> +bias -> sigmoid
    h = jnp.dot(h, w4_ref[...], preferred_element_type=jnp.float32) + b4_ref[...]
    # sigmoid(x) = 0.5 * (tanh(0.5 x) + 1): single EUP push per element.
    o_ref[...] = 0.5 * (jnp.tanh(0.5 * h) + 1.0)


def prepare_params(params, latent_size):
    """One-time weight prep (hoisted out of the forward): zero-pad to
    MXU-friendly shapes and cast weights to bf16.  Biases stay f32.
    Zero padding keeps padded hidden lanes exactly 0 through ReLU."""
    lat_pad = _round_up(latent_size, 128)
    return {
        "w1": _pad2(params["w1"], lat_pad, HIDDEN_PAD).astype(jnp.bfloat16),
        "b1": _pad2(params["b1"], 1, HIDDEN_PAD),
        "w2": _pad2(params["w2"], HIDDEN_PAD, HIDDEN_PAD).astype(jnp.bfloat16),
        "b2": _pad2(params["b2"], 1, HIDDEN_PAD),
        "w3": _pad2(params["w3"], HIDDEN_PAD, HIDDEN_PAD).astype(jnp.bfloat16),
        "b3": _pad2(params["b3"], 1, HIDDEN_PAD),
        # K-padded only; output stays at its true 784 width.
        "w4": _pad2(params["w4"], HIDDEN_PAD, OUT).astype(jnp.bfloat16),
        "b4": params["b4"],                       # (1, 784) f32
    }


def decoder_forward(x, prepped):
    """x: (B, latent) float32, prepped: output of prepare_params
    -> (B, 1, 28, 28) float32."""
    B, latent = x.shape
    lat_pad = prepped["w1"].shape[0]

    TM = _choose_tm(B)
    B_pad = _round_up(B, TM)
    # Pad batch to a tile multiple (no masking needed) and latent to 128
    # (zero x cols match the zero w1 rows, so the math is unchanged).
    x = jnp.pad(x, ((0, B_pad - B), (0, lat_pad - latent)))
    num_tiles = B_pad // TM

    # Weights/biases: full-array blocks with constant index_map -> DMA'd once,
    # VMEM-resident across all grid steps.
    def resident(shape):
        return pl.BlockSpec(shape, lambda i: (0, 0))

    x_spec = pl.BlockSpec((TM, lat_pad), lambda i: (i, 0))
    out_spec = pl.BlockSpec((TM, OUT), lambda i: (i, 0))

    # Advisory cost estimate (per padded batch).
    flops_per_row = 2 * (lat_pad * HIDDEN_PAD
                         + 2 * HIDDEN_PAD * HIDDEN_PAD
                         + HIDDEN_PAD * OUT)
    weight_bytes = 2 * (lat_pad * HIDDEN_PAD + 2 * HIDDEN_PAD * HIDDEN_PAD
                        + HIDDEN_PAD * OUT) + 4 * (3 * HIDDEN_PAD + OUT)
    cost = pl.CostEstimate(
        flops=flops_per_row * B_pad,
        transcendentals=B_pad * OUT,
        bytes_accessed=weight_bytes + 4 * B_pad * (lat_pad + OUT),
    )

    flat = pl.pallas_call(
        _decoder_kernel,
        out_shape=jax.ShapeDtypeStruct((B_pad, OUT), jnp.float32),
        grid=(num_tiles,),
        in_specs=[
            x_spec,
            resident((lat_pad, HIDDEN_PAD)), resident((1, HIDDEN_PAD)),
            resident((HIDDEN_PAD, HIDDEN_PAD)), resident((1, HIDDEN_PAD)),
            resident((HIDDEN_PAD, HIDDEN_PAD)), resident((1, HIDDEN_PAD)),
            resident((HIDDEN_PAD, OUT)), resident((1, OUT)),
        ],
        out_specs=out_spec,
        compiler_params=pltpu.CompilerParams(
            dimension_semantics=("parallel",),   # batch tiles -> v7x dual TC
            vmem_limit_bytes=32 * 1024 * 1024,   # safe on v5e/v6e/v7x
        ),
        cost_estimate=cost,
    )(x, prepped["w1"], prepped["b1"], prepped["w2"], prepped["b2"],
      prepped["w3"], prepped["b3"], prepped["w4"], prepped["b4"])

    # Drop batch padding (no column padding anymore), then the PyTorch
    # View(-1, 1, 28, 28) reshape.
    return flat[:B].reshape(B, 1, IMG_H, IMG_W)


def init_params(key, latent_size):
    """PyTorch-style Linear init: U(-1/sqrt(fan_in), 1/sqrt(fan_in)).
    Weights stored (in_features, out_features); biases (1, out_features)."""
    dims = [(latent_size, HIDDEN), (HIDDEN, HIDDEN), (HIDDEN, HIDDEN), (HIDDEN, OUT)]
    params = {}
    for idx, (fan_in, fan_out) in enumerate(dims, start=1):
        key, kw, kb = jax.random.split(key, 3)
        bound = 1.0 / jnp.sqrt(jnp.float32(fan_in))
        params[f"w{idx}"] = jax.random.uniform(
            kw, (fan_in, fan_out), jnp.float32, minval=-bound, maxval=bound)
        params[f"b{idx}"] = jax.random.uniform(
            kb, (1, fan_out), jnp.float32, minval=-bound, maxval=bound)
    return params


def decoder_reference(x, params):
    """Pure-JAX f32 reference for correctness check (unpadded weights)."""
    h = jnp.maximum(x @ params["w1"] + params["b1"], 0.0)
    h = jnp.maximum(h @ params["w2"] + params["b2"], 0.0)
    h = jnp.maximum(h @ params["w3"] + params["b3"], 0.0)
    h = jax.nn.sigmoid(h @ params["w4"] + params["b4"])
    return h.reshape(x.shape[0], 1, IMG_H, IMG_W)


if __name__ == "__main__":
    latent_size = 32
    batch = 2

    key = jax.random.PRNGKey(0)
    key, kx = jax.random.split(key)
    x = jax.random.normal(kx, (batch, latent_size), jnp.float32)
    params = init_params(key, latent_size)

    # One-time weight prep (padding + bf16 cast) -- NOT done per forward call.
    prepped = jax.block_until_ready(prepare_params(params, latent_size))

    out = decoder_forward(x, prepped)
    out = jax.block_until_ready(out)

    assert out.shape == (batch, 1, IMG_H, IMG_W)
    ref = decoder_reference(x, params)
    # bf16 MXU inputs (f32 accumulation): loosened tolerance vs f32 reference.
    assert jnp.allclose(out, ref, atol=2e-2, rtol=0), (
        float(jnp.max(jnp.abs(out - ref))))

    print("KERNEL_OK")
</pallas_src>

<mosaic_0001>
module attributes {stable_mosaic.version = 11 : i64} {
  func.func @_decoder_kernel(%arg0: i32, %arg1: memref<16x128xf32, #tpu.memory_space<vmem>>, %arg2: memref<128x256xbf16, #tpu.memory_space<vmem>>, %arg3: memref<1x256xf32, #tpu.memory_space<vmem>>, %arg4: memref<256x256xbf16, #tpu.memory_space<vmem>>, %arg5: memref<1x256xf32, #tpu.memory_space<vmem>>, %arg6: memref<256x256xbf16, #tpu.memory_space<vmem>>, %arg7: memref<1x256xf32, #tpu.memory_space<vmem>>, %arg8: memref<256x784xbf16, #tpu.memory_space<vmem>>, %arg9: memref<1x784xf32, #tpu.memory_space<vmem>>, %arg10: memref<16x784xf32, #tpu.memory_space<vmem>>) attributes {dimension_semantics = [#tpu.dimension_semantics<parallel>], iteration_bounds = array<i64: 1>, scalar_prefetch = 0 : i64, scratch_operands = 0 : i64, tpu.core_type = #tpu.core_type<tc>, window_params = [{transform_indices = @transform_0, window_bounds = array<i64: 16, 128>}, {pipeline_mode = #tpu.pipeline_mode<synchronous>, transform_indices = @transform_1, window_bounds = array<i64: 128, 256>}, {pipeline_mode = #tpu.pipeline_mode<synchronous>, transform_indices = @transform_2, window_bounds = array<i64: 1, 256>}, {pipeline_mode = #tpu.pipeline_mode<synchronous>, transform_indices = @transform_3, window_bounds = array<i64: 256, 256>}, {pipeline_mode = #tpu.pipeline_mode<synchronous>, transform_indices = @transform_4, window_bounds = array<i64: 1, 256>}, {pipeline_mode = #tpu.pipeline_mode<synchronous>, transform_indices = @transform_5, window_bounds = array<i64: 256, 256>}, {pipeline_mode = #tpu.pipeline_mode<synchronous>, transform_indices = @transform_6, window_bounds = array<i64: 1, 256>}, {pipeline_mode = #tpu.pipeline_mode<synchronous>, transform_indices = @transform_7, window_bounds = array<i64: 256, 784>}, {pipeline_mode = #tpu.pipeline_mode<synchronous>, transform_indices = @transform_8, window_bounds = array<i64: 1, 784>}, {transform_indices = @transform_9, window_bounds = array<i64: 16, 784>}]} {
    %c0 = arith.constant 0 : index
    %c0_0 = arith.constant 0 : index
    %0 = vector.load %arg1[%c0, %c0_0] : memref<16x128xf32, #tpu.memory_space<vmem>>, vector<16x128xf32>
    %1 = arith.truncf %0 : vector<16x128xf32> to vector<16x128xbf16>
    %c0_1 = arith.constant 0 : index
    %c0_2 = arith.constant 0 : index
    %2 = vector.load %arg2[%c0_1, %c0_2] : memref<128x256xbf16, #tpu.memory_space<vmem>>, vector<128x256xbf16>
    %cst = arith.constant dense<0.000000e+00> : vector<16x256xf32>
    %3 = tpu.matmul %1, %2, %cst {dimension_numbers = #tpu.dot_dimension_numbers<[1], [0], [0], [1], [0, 0, 1, 1], [], []>} : vector<16x128xbf16>, vector<128x256xbf16>, vector<16x256xf32> -> vector<16x256xf32>
    %c0_3 = arith.constant 0 : index
    %c0_4 = arith.constant 0 : index
    %4 = vector.load %arg3[%c0_3, %c0_4] : memref<1x256xf32, #tpu.memory_space<vmem>>, vector<1x256xf32>
    %5 = vector.broadcast %4 : vector<1x256xf32> to vector<16x256xf32>
    %6 = arith.addf %3, %5 : vector<16x256xf32>
    %cst_5 = arith.constant 0.000000e+00 : f32
    %7 = vector.broadcast %cst_5 : f32 to vector<16x256xf32>
    %8 = arith.maximumf %6, %7 : vector<16x256xf32>
    %9 = arith.truncf %8 : vector<16x256xf32> to vector<16x256xbf16>
    %c0_6 = arith.constant 0 : index
    %c0_7 = arith.constant 0 : index
    %10 = vector.load %arg4[%c0_6, %c0_7] : memref<256x256xbf16, #tpu.memory_space<vmem>>, vector<256x256xbf16>
    %cst_8 = arith.constant dense<0.000000e+00> : vector<16x256xf32>
    %11 = tpu.matmul %9, %10, %cst_8 {dimension_numbers = #tpu.dot_dimension_numbers<[1], [0], [0], [1], [0, 0, 1, 1], [], []>} : vector<16x256xbf16>, vector<256x256xbf16>, vector<16x256xf32> -> vector<16x256xf32>
    %c0_9 = arith.constant 0 : index
    %c0_10 = arith.constant 0 : index
    %12 = vector.load %arg5[%c0_9, %c0_10] : memref<1x256xf32, #tpu.memory_space<vmem>>, vector<1x256xf32>
    %13 = vector.broadcast %12 : vector<1x256xf32> to vector<16x256xf32>
    %14 = arith.addf %11, %13 : vector<16x256xf32>
    %cst_11 = arith.constant 0.000000e+00 : f32
    %15 = vector.broadcast %cst_11 : f32 to vector<16x256xf32>
    %16 = arith.maximumf %14, %15 : vector<16x256xf32>
    %17 = arith.truncf %16 : vector<16x256xf32> to vector<16x256xbf16>
    %c0_12 = arith.constant 0 : index
    %c0_13 = arith.constant 0 : index
    %18 = vector.load %arg6[%c0_12, %c0_13] : memref<256x256xbf16, #tpu.memory_space<vmem>>, vector<256x256xbf16>
    %cst_14 = arith.constant dense<0.000000e+00> : vector<16x256xf32>
    %19 = tpu.matmul %17, %18, %cst_14 {dimension_numbers = #tpu.dot_dimension_numbers<[1], [0], [0], [1], [0, 0, 1, 1], [], []>} : vector<16x256xbf16>, vector<256x256xbf16>, vector<16x256xf32> -> vector<16x256xf32>
    %c0_15 = arith.constant 0 : index
    %c0_16 = arith.constant 0 : index
    %20 = vector.load %arg7[%c0_15, %c0_16] : memref<1x256xf32, #tpu.memory_space<vmem>>, vector<1x256xf32>
    %21 = vector.broadcast %20 : vector<1x256xf32> to vector<16x256xf32>
    %22 = arith.addf %19, %21 : vector<16x256xf32>
    %cst_17 = arith.constant 0.000000e+00 : f32
    %23 = vector.broadcast %cst_17 : f32 to vector<16x256xf32>
    %24 = arith.maximumf %22, %23 : vector<16x256xf32>
    %25 = arith.truncf %24 : vector<16x256xf32> to vector<16x256xbf16>
    %c0_18 = arith.constant 0 : index
    %c0_19 = arith.constant 0 : index
    %26 = vector.load %arg8[%c0_18, %c0_19] : memref<256x784xbf16, #tpu.memory_space<vmem>>, vector<256x784xbf16>
    %cst_20 = arith.constant dense<0.000000e+00> : vector<16x784xf32>
    %27 = tpu.matmul %25, %26, %cst_20 {dimension_numbers = #tpu.dot_dimension_numbers<[1], [0], [0], [1], [0, 0, 1, 1], [], []>} : vector<16x256xbf16>, vector<256x784xbf16>, vector<16x784xf32> -> vector<16x784xf32>
    %c0_21 = arith.constant 0 : index
    %c0_22 = arith.constant 0 : index
    %28 = vector.load %arg9[%c0_21, %c0_22] : memref<1x784xf32, #tpu.memory_space<vmem>>, vector<1x784xf32>
    %29 = vector.broadcast %28 : vector<1x784xf32> to vector<16x784xf32>
    %30 = arith.addf %27, %29 : vector<16x784xf32>
    %cst_23 = arith.constant 5.000000e-01 : f32
    %31 = vector.broadcast %cst_23 : f32 to vector<16x784xf32>
    %32 = arith.mulf %31, %30 : vector<16x784xf32>
    %33 = math.tanh %32 : vector<16x784xf32>
    %cst_24 = arith.constant 1.000000e+00 : f32
    %34 = vector.broadcast %cst_24 : f32 to vector<16x784xf32>
    %35 = arith.addf %33, %34 : vector<16x784xf32>
    %cst_25 = arith.constant 5.000000e-01 : f32
    %36 = vector.broadcast %cst_25 : f32 to vector<16x784xf32>
    %37 = arith.mulf %36, %35 : vector<16x784xf32>
    %c0_26 = arith.constant 0 : index
    %c0_27 = arith.constant 0 : index
    %38 = vector.load %arg10[%c0_26, %c0_27] : memref<16x784xf32, #tpu.memory_space<vmem>>, vector<16x784xf32>
    tpu.vector_store %arg10[%c0_26, %c0_27], %37 {strides = array<i32>} : memref<16x784xf32, #tpu.memory_space<vmem>>, vector<16x784xf32>,
    return
  }
  func.func @transform_0(%arg0: i32) -> (i32, i32) {
    %c0_i32 = arith.constant 0 : i32
    %c0_i32_0 = arith.constant 0 : i32
    return %arg0, %c0_i32 : i32, i32
  }
  func.func @transform_1(%arg0: i32) -> (i32, i32) {
    %c0_i32 = arith.constant 0 : i32
    %c0_i32_0 = arith.constant 0 : i32
    %c0_i32_1 = arith.constant 0 : i32
    return %c0_i32, %c0_i32_0 : i32, i32
  }
  func.func @transform_2(%arg0: i32) -> (i32, i32) {
    %c0_i32 = arith.constant 0 : i32
    %c0_i32_0 = arith.constant 0 : i32
    %c0_i32_1 = arith.constant 0 : i32
    return %c0_i32, %c0_i32_0 : i32, i32
  }
  func.func @transform_3(%arg0: i32) -> (i32, i32) {
    %c0_i32 = arith.constant 0 : i32
    %c0_i32_0 = arith.constant 0 : i32
    %c0_i32_1 = arith.constant 0 : i32
    return %c0_i32, %c0_i32_0 : i32, i32
  }
  func.func @transform_4(%arg0: i32) -> (i32, i32) {
    %c0_i32 = arith.constant 0 : i32
    %c0_i32_0 = arith.constant 0 : i32
    %c0_i32_1 = arith.constant 0 : i32
    return %c0_i32, %c0_i32_0 : i32, i32
  }
  func.func @transform_5(%arg0: i32) -> (i32, i32) {
    %c0_i32 = arith.constant 0 : i32
    %c0_i32_0 = arith.constant 0 : i32
    %c0_i32_1 = arith.constant 0 : i32
    return %c0_i32, %c0_i32_0 : i32, i32
  }
  func.func @transform_6(%arg0: i32) -> (i32, i32) {
    %c0_i32 = arith.constant 0 : i32
    %c0_i32_0 = arith.constant 0 : i32
    %c0_i32_1 = arith.constant 0 : i32
    return %c0_i32, %c0_i32_0 : i32, i32
  }
  func.func @transform_7(%arg0: i32) -> (i32, i32) {
    %c0_i32 = arith.constant 0 : i32
    %c0_i32_0 = arith.constant 0 : i32
    %c0_i32_1 = arith.constant 0 : i32
    return %c0_i32, %c0_i32_0 : i32, i32
  }
  func.func @transform_8(%arg0: i32) -> (i32, i32) {
    %c0_i32 = arith.constant 0 : i32
    %c0_i32_0 = arith.constant 0 : i32
    %c0_i32_1 = arith.constant 0 : i32
    return %c0_i32, %c0_i32_0 : i32, i32
  }
  func.func @transform_9(%arg0: i32) -> (i32, i32) {
    %c0_i32 = arith.constant 0 : i32
    %c0_i32_0 = arith.constant 0 : i32
    return %arg0, %c0_i32 : i32, i32
  }
}

</mosaic_0001>

<llo_original>
// kernel: tpu_custom_call.1
$region0: #{tpu_custom_call.1}
  #allocation0 [shape = 'u32[]', space=smem, size = 0x4, offset = 0x4, fixed_abs, tag = 'smem constant byte address 0x4 - core index']
  #allocation1 [shape = 'u32[144,128]{1,0:T(1,128)}', space=vmem, size = 0x12000, scoped, tag = 'internal scratch']
  %s0 = inlined_call_operand.vmem [shape: f32[16,128], index: 0, kind: input, shape index: {}]
  %s1 = inlined_call_operand.vmem [shape: bf16[128,256], index: 1, kind: input, shape index: {}]
  %s2 = inlined_call_operand.vmem [shape: f32[1,256], index: 2, kind: input, shape index: {}]
  %s3 = inlined_call_operand.vmem [shape: bf16[256,256], index: 3, kind: input, shape index: {}]
  %s4 = inlined_call_operand.vmem [shape: f32[1,256], index: 4, kind: input, shape index: {}]
  %s5 = inlined_call_operand.vmem [shape: bf16[256,256], index: 5, kind: input, shape index: {}]
  %s6 = inlined_call_operand.vmem [shape: f32[1,256], index: 6, kind: input, shape index: {}]
  %s7 = inlined_call_operand.vmem [shape: bf16[256,784], index: 7, kind: input, shape index: {}]
  %s8 = inlined_call_operand.vmem [shape: f32[1,784], index: 8, kind: input, shape index: {}]
  %s9 = inlined_call_operand.hbm [shape: f32[16,784], index: 9, kind: output, shape index: {}]
  %s10 = sld [smem:[#allocation0]]
  $region46: #{tpu_custom_call.1} parent=0
    _
  %s12 = ssub.s32 1, %s10
  %s13 = scalar_select 0, %s12, %s10
  $region1: #{tpu_custom_call.1} parent=0
    #allocation2 [shape = 'u8[57344]{0}', space=vmem, size = 0xe000, scoped, tag = 'output window, operand 0, single buffered']
    #allocation3 [shape = 's32[1]{0}', space=sflag, size = 0x4, scoped, tag = 'scoped memory for tpu_custom_call.1']
    %14 = vsyncpa [#allocation3], 0
    // Predicated region
    $region2: #{tpu_custom_call.1} parent=1 // pred_check
      _
    $region3: #{tpu_custom_call.1} parent=1 // pred_check_branch
      %16 = sbr.rel (0) target = $region5
    $region4: #{tpu_custom_call.1} parent=1 // pred_region
      _
    $region5: #{tpu_custom_call.1} parent=1 // pred_fallthru
      _
    // Predicated region
    $region6: #{tpu_custom_call.1} parent=1 // pred_check
      _
    $region7: #{tpu_custom_call.1} parent=1 // pred_check_branch
      %18 = sbr.rel (0) target = $region9
    $region8: #{tpu_custom_call.1} parent=1 // pred_region
      _
    $region9: #{tpu_custom_call.1} parent=1 // pred_fallthru
      _
    // Predicated region
    $region10: #{tpu_custom_call.1} parent=1 // pred_check
      _
    $region11: #{tpu_custom_call.1} parent=1 // pred_check_branch
      %20 = sbr.rel (0) target = $region13
    $region12: #{tpu_custom_call.1} parent=1 // pred_region
      _
    $region13: #{tpu_custom_call.1} parent=1 // pred_fallthru
      _
    // Predicated region
    $region14: #{tpu_custom_call.1} parent=1 // pred_check
      _
    $region15: #{tpu_custom_call.1} parent=1 // pred_check_branch
      %22 = sbr.rel (0) target = $region17
    $region16: #{tpu_custom_call.1} parent=1 // pred_region
      _
    $region17: #{tpu_custom_call.1} parent=1 // pred_fallthru
      _
    // Predicated region
    $region18: #{tpu_custom_call.1} parent=1 // pred_check
      _
    $region19: #{tpu_custom_call.1} parent=1 // pred_check_branch
      %24 = sbr.rel (0) target = $region21
    $region20: #{tpu_custom_call.1} parent=1 // pred_region
      _
    $region21: #{tpu_custom_call.1} parent=1 // pred_fallthru
      _
    // Predicated region
    $region22: #{tpu_custom_call.1} parent=1 // pred_check
      _
    $region23: #{tpu_custom_call.1} parent=1 // pred_check_branch
      %26 = sbr.rel (0) target = $region25
    $region24: #{tpu_custom_call.1} parent=1 // pred_region
      _
    $region25: #{tpu_custom_call.1} parent=1 // pred_fallthru
      _
    // Predicated region
    $region26: #{tpu_custom_call.1} parent=1 // pred_check
      _
    $region27: #{tpu_custom_call.1} parent=1 // pred_check_branch
      %28 = sbr.rel (0) target = $region29
    $region28: #{tpu_custom_call.1} parent=1 // pred_region
      _
    $region29: #{tpu_custom_call.1} parent=1 // pred_fallthru
      _
    // Predicated region
    $region30: #{tpu_custom_call.1} parent=1 // pred_check
      _
    $region31: #{tpu_custom_call.1} parent=1 // pred_check_branch
      %30 = sbr.rel (0) target = $region33
    $region32: #{tpu_custom_call.1} parent=1 // pred_region
      _
    $region33: #{tpu_custom_call.1} parent=1 // pred_fallthru
      _
    // Predicated region
    $region34: #{tpu_custom_call.1} parent=1 // pred_check
      _
    $region35: #{tpu_custom_call.1} parent=1 // pred_check_branch
      %32 = sbr.rel (0) target = $region37
    $region36: #{tpu_custom_call.1} parent=1 // pred_region
      _
    $region37: #{tpu_custom_call.1} parent=1 // pred_fallthru
      _
    %v34 = vld [vmem:[%s0] sm:$0xff]
    %v35 = vld [vmem:[%s0 + $0x8] sm:$0xff]
    %v36 = vpack.c.bf16 %v35, %v34
    %v37 = vld [vmem:[%s1] sm:$0xff]
    %v38 = vld [vmem:[%s1 + $0x8] sm:$0xff]
    %v39 = vld [vmem:[%s1 + $0x10] sm:$0xff]
    %v40 = vld [vmem:[%s1 + $0x18] sm:$0xff]
    %v41 = vld [vmem:[%s1 + $0x20] sm:$0xff]
    %v42 = vld [vmem:[%s1 + $0x28] sm:$0xff]
    %v43 = vld [vmem:[%s1 + $0x30] sm:$0xff]
    %v44 = vld [vmem:[%s1 + $0x38] sm:$0xff]
    %v45 = vld [vmem:[%s1 + $0x40] sm:$0xff]
    %v46 = vld [vmem:[%s1 + $0x48] sm:$0xff]
    %v47 = vld [vmem:[%s1 + $0x50] sm:$0xff]
    %v48 = vld [vmem:[%s1 + $0x58] sm:$0xff]
    %v49 = vld [vmem:[%s1 + $0x60] sm:$0xff]
    %v50 = vld [vmem:[%s1 + $0x68] sm:$0xff]
    %v51 = vld [vmem:[%s1 + $0x70] sm:$0xff]
    %v52 = vld [vmem:[%s1 + $0x78] sm:$0xff]
    %v53 = vld [vmem:[%s2] sm:$0x3]
    %v55 = vlaneseq
    %v56 = vshrl.u32 %v55, 7
    %v57 = vsub.s32 0, %v56
    %v58 = vrot.slane %v53, %v57
    %v59 = vlaneseq
    %v60 = vshrl.u32 %v59, 7
    %v61 = vsub.s32 1, %v60
    %v62 = vrot.slane %v53, %v61
    %v81 = vunpack.c.l.b16 %v37
    %v82 = vunpack.c.h.b16 %v37
    %v83 = vunpack.c.l.b16 %v38
    %v84 = vunpack.c.h.b16 %v38
    %v85 = vunpack.c.l.b16 %v39
    %v86 = vunpack.c.h.b16 %v39
    %v87 = vunpack.c.l.b16 %v40
    %v88 = vunpack.c.h.b16 %v40
    %v89 = vunpack.c.l.b16 %v41
    %v90 = vunpack.c.h.b16 %v41
    %v91 = vunpack.c.l.b16 %v42
    %v92 = vunpack.c.h.b16 %v42
    %v93 = vunpack.c.l.b16 %v43
    %v94 = vunpack.c.h.b16 %v43
    %v95 = vunpack.c.l.b16 %v44
    %v96 = vunpack.c.h.b16 %v44
    %v97 = vunpack.c.l.b16 %v45
    %v98 = vunpack.c.h.b16 %v45
    %v99 = vunpack.c.l.b16 %v46
    %v100 = vunpack.c.h.b16 %v46
    %v101 = vunpack.c.l.b16 %v47
    %v102 = vunpack.c.h.b16 %v47
    %v103 = vunpack.c.l.b16 %v48
    %v104 = vunpack.c.h.b16 %v48
    %v105 = vunpack.c.l.b16 %v49
    %v106 = vunpack.c.h.b16 %v49
    %v107 = vunpack.c.l.b16 %v50
    %v108 = vunpack.c.h.b16 %v50
    %v109 = vunpack.c.l.b16 %v51
    %v110 = vunpack.c.h.b16 %v51
    %v111 = vunpack.c.l.b16 %v52
    %v112 = vunpack.c.h.b16 %v52
    %v113 = vpack.c.b16 %v83, %v81
    %v114 = vpack.c.b16 %v84, %v82
    %v115 = vpack.c.b16 %v87, %v85
    %v116 = vpack.c.b16 %v88, %v86
    %v117 = vpack.c.b16 %v91, %v89
    %v118 = vpack.c.b16 %v92, %v90
    %v119 = vpack.c.b16 %v95, %v93
    %v120 = vpack.c.b16 %v96, %v94
    %v121 = vpack.c.b16 %v99, %v97
    %v122 = vpack.c.b16 %v100, %v98
    %v123 = vpack.c.b16 %v103, %v101
    %v124 = vpack.c.b16 %v104, %v102
    %v125 = vpack.c.b16 %v107, %v105
    %v126 = vpack.c.b16 %v108, %v106
    %v127 = vpack.c.b16 %v111, %v109
    %v128 = vpack.c.b16 %v112, %v110
    %145 = vmatprep.subr.bf16.mxu0 %v114
    %146 = vmatpush1.bf16.msra.mxu0 %v113
    %147 = vmatprep.subr.bf16.mxu0 %v116
    %148 = vmatpush1.bf16.msra.mxu0 %v115
    %149 = vmatprep.subr.bf16.mxu0 %v118
    %150 = vmatpush1.bf16.msra.mxu0 %v117
    %151 = vmatprep.subr.bf16.mxu0 %v120
    %152 = vmatpush1.bf16.msra.mxu0 %v119
    %153 = vmatprep.subr.bf16.mxu0 %v122
    %154 = vmatpush1.bf16.msra.mxu0 %v121
    %155 = vmatprep.subr.bf16.mxu0 %v124
    %156 = vmatpush1.bf16.msra.mxu0 %v123
    %157 = vmatprep.subr.bf16.mxu0 %v126
    %158 = vmatpush1.bf16.msra.mxu0 %v125
    %159 = vmatprep.subr.bf16.mxu0 %v128
    %160 = vmatpush1.bf16.msra.mxu0 %v127
    %161 = vmatprep.subr.bf16.mxu0 0
    %162 = vmatpush1.bf16.msra.mxu0 0
    %163 = vmatprep.subr.bf16.mxu0 0
    %164 = vmatpush1.bf16.msra.mxu0 0
    %165 = vmatprep.subr.bf16.mxu0 0
    %166 = vmatpush1.bf16.msra.mxu0 0
    %167 = vmatprep.subr.bf16.mxu0 0
    %168 = vmatpush1.bf16.msra.mxu0 0
    %169 = vmatprep.subr.bf16.mxu0 0
    %170 = vmatpush1.bf16.msra.mxu0 0
    %171 = vmatprep.subr.bf16.mxu0 0
    %172 = vmatpush1.bf16.msra.mxu0 0
    %173 = vmatprep.subr.bf16.mxu0 0
    %174 = vmatpush1.bf16.msra.mxu0 0
    %175 = vmatprep.subr.bf16.mxu0 0
    %176 = vmatpush1.bf16.msra.mxu0 0
    %177 = vmatprep.mubr.bf16.mxu0 0
    %178 = vmatmul.mubr.bf16.gmra.mrb[0].mxu0 %v36
    %v179 = vpop.f32.mrb[0].mxu0
    %v180 = vadd.f32 %v58, %v179
    %v181 = vpop.f32.mrb[0].mxu0
    %v182 = vadd.f32 %v62, %v181
    %v183 = vpop.f32.mrb[0].mxu0
    %v184 = vadd.f32 %v58, %v183
    %v185 = vpop.f32.mrb[0].mxu0
    %v186 = vadd.f32 %v62, %v185
    %187 = vdwg.mxu0
    %v188 = vmax.f32 %v180, 0.0
    %v189 = vmax.f32 %v182, 0.0
    %v190 = vmax.f32 %v184, 0.0
    %v191 = vmax.f32 %v186, 0.0
    %v192 = vpack.c.bf16 %v190, %v188
    %v193 = vpack.c.bf16 %v191, %v189
    %v194 = vld [vmem:[%s3] sm:$0xff]
    %v195 = vld [vmem:[%s3 + $0x8] sm:$0xff]
    %v196 = vld [vmem:[%s3 + $0x10] sm:$0xff]
    %v197 = vld [vmem:[%s3 + $0x18] sm:$0xff]
    %v198 = vld [vmem:[%s3 + $0x20] sm:$0xff]
    %v199 = vld [vmem:[%s3 + $0x28] sm:$0xff]
    %v200 = vld [vmem:[%s3 + $0x30] sm:$0xff]
    %v201 = vld [vmem:[%s3 + $0x38] sm:$0xff]
    %v202 = vld [vmem:[%s3 + $0x40] sm:$0xff]
    %v203 = vld [vmem:[%s3 + $0x48] sm:$0xff]
    %v204 = vld [vmem:[%s3 + $0x50] sm:$0xff]
    %v205 = vld [vmem:[%s3 + $0x58] sm:$0xff]
    %v206 = vld [vmem:[%s3 + $0x60] sm:$0xff]
    %v207 = vld [vmem:[%s3 + $0x68] sm:$0xff]
    %v208 = vld [vmem:[%s3 + $0x70] sm:$0xff]
    %v209 = vld [vmem:[%s3 + $0x78] sm:$0xff]
    %v210 = vld [vmem:[%s3 + $0x80] sm:$0xff]
    %v211 = vld [vmem:[%s3 + $0x88] sm:$0xff]
    %v212 = vld [vmem:[%s3 + $0x90] sm:$0xff]
    %v213 = vld [vmem:[%s3 + $0x98] sm:$0xff]
    %v214 = vld [vmem:[%s3 + $0xa0] sm:$0xff]
    %v215 = vld [vmem:[%s3 + $0xa8] sm:$0xff]
    %v216 = vld [vmem:[%s3 + $0xb0] sm:$0xff]
    %v217 = vld [vmem:[%s3 + $0xb8] sm:$0xff]
    %v218 = vld [vmem:[%s3 + $0xc0] sm:$0xff]
    %v219 = vld [vmem:[%s3 + $0xc8] sm:$0xff]
    %v220 = vld [vmem:[%s3 + $0xd0] sm:$0xff]
    %v221 = vld [vmem:[%s3 + $0xd8] sm:$0xff]
    %v222 = vld [vmem:[%s3 + $0xe0] sm:$0xff]
    %v223 = vld [vmem:[%s3 + $0xe8] sm:$0xff]
    %v224 = vld [vmem:[%s3 + $0xf0] sm:$0xff]
    %v225 = vld [vmem:[%s3 + $0xf8] sm:$0xff]
    %v226 = vld [vmem:[%s4] sm:$0x3]
    %v228 = vlaneseq
    %v229 = vshrl.u32 %v228, 7
    %v230 = vsub.s32 0, %v229
    %v231 = vrot.slane %v226, %v230
    %v232 = vlaneseq
    %v233 = vshrl.u32 %v232, 7
    %v234 = vsub.s32 1, %v233
    %v235 = vrot.slane %v226, %v234
    %v270 = vunpack.c.l.b16 %v194
    %v271 = vunpack.c.h.b16 %v194
    %v272 = vunpack.c.l.b16 %v195
    %v273 = vunpack.c.h.b16 %v195
    %v274 = vunpack.c.l.b16 %v196
    %v275 = vunpack.c.h.b16 %v196
    %v276 = vunpack.c.l.b16 %v197
    %v277 = vunpack.c.h.b16 %v197
    %v278 = vunpack.c.l.b16 %v198
    %v279 = vunpack.c.h.b16 %v198
    %v280 = vunpack.c.l.b16 %v199
    %v281 = vunpack.c.h.b16 %v199
    %v282 = vunpack.c.l.b16 %v200
    %v283 = vunpack.c.h.b16 %v200
    %v284 = vunpack.c.l.b16 %v201
    %v285 = vunpack.c.h.b16 %v201
    %v286 = vunpack.c.l.b16 %v202
    %v287 = vunpack.c.h.b16 %v202
    %v288 = vunpack.c.l.b16 %v203
    %v289 = vunpack.c.h.b16 %v203
    %v290 = vunpack.c.l.b16 %v204
    %v291 = vunpack.c.h.b16 %v204
    %v292 = vunpack.c.l.b16 %v205
    %v293 = vunpack.c.h.b16 %v205
    %v294 = vunpack.c.l.b16 %v206
    %v295 = vunpack.c.h.b16 %v206
    %v296 = vunpack.c.l.b16 %v207
    %v297 = vunpack.c.h.b16 %v207
    %v298 = vunpack.c.l.b16 %v208
    %v299 = vunpack.c.h.b16 %v208
    %v300 = vunpack.c.l.b16 %v209
    %v301 = vunpack.c.h.b16 %v209
    %v302 = vunpack.c.l.b16 %v210
    %v303 = vunpack.c.h.b16 %v210
    %v304 = vunpack.c.l.b16 %v211
    %v305 = vunpack.c.h.b16 %v211
    %v306 = vunpack.c.l.b16 %v212
    %v307 = vunpack.c.h.b16 %v212
    %v308 = vunpack.c.l.b16 %v213
    %v309 = vunpack.c.h.b16 %v213
    %v310 = vunpack.c.l.b16 %v214
    %v311 = vunpack.c.h.b16 %v214
    %v312 = vunpack.c.l.b16 %v215
    %v313 = vunpack.c.h.b16 %v215
    %v314 = vunpack.c.l.b16 %v216
    %v315 = vunpack.c.h.b16 %v216
    %v316 = vunpack.c.l.b16 %v217
    %v317 = vunpack.c.h.b16 %v217
    %v318 = vunpack.c.l.b16 %v218
    %v319 = vunpack.c.h.b16 %v218
    %v320 = vunpack.c.l.b16 %v219
    %v321 = vunpack.c.h.b16 %v219
    %v322 = vunpack.c.l.b16 %v220
    %v323 = vunpack.c.h.b16 %v220
    %v324 = vunpack.c.l.b16 %v221
    %v325 = vunpack.c.h.b16 %v221
    %v326 = vunpack.c.l.b16 %v222
    %v327 = vunpack.c.h.b16 %v222
    %v328 = vunpack.c.l.b16 %v223
    %v329 = vunpack.c.h.b16 %v223
    %v330 = vunpack.c.l.b16 %v224
    %v331 = vunpack.c.h.b16 %v224
    %v332 = vunpack.c.l.b16 %v225
    %v333 = vunpack.c.h.b16 %v225
    %v334 = vpack.c.b16 %v272, %v270
    %v335 = vpack.c.b16 %v273, %v271
    %v336 = vpack.c.b16 %v276, %v274
    %v337 = vpack.c.b16 %v277, %v275
    %v338 = vpack.c.b16 %v280, %v278
    %v339 = vpack.c.b16 %v281, %v279
    %v340 = vpack.c.b16 %v284, %v282
    %v341 = vpack.c.b16 %v285, %v283
    %v342 = vpack.c.b16 %v288, %v286
    %v343 = vpack.c.b16 %v289, %v287
    %v344 = vpack.c.b16 %v292, %v290
    %v345 = vpack.c.b16 %v293, %v291
    %v346 = vpack.c.b16 %v296, %v294
    %v347 = vpack.c.b16 %v297, %v295
    %v348 = vpack.c.b16 %v300, %v298
    %v349 = vpack.c.b16 %v301, %v299
    %v350 = vpack.c.b16 %v304, %v302
    %v351 = vpack.c.b16 %v305, %v303
    %v352 = vpack.c.b16 %v308, %v306
    %v353 = vpack.c.b16 %v309, %v307
    %v354 = vpack.c.b16 %v312, %v310
    %v355 = vpack.c.b16 %v313, %v311
    %v356 = vpack.c.b16 %v316, %v314
    %v357 = vpack.c.b16 %v317, %v315
    %v358 = vpack.c.b16 %v320, %v318
    %v359 = vpack.c.b16 %v321, %v319
    %v360 = vpack.c.b16 %v324, %v322
    %v361 = vpack.c.b16 %v325, %v323
    %v362 = vpack.c.b16 %v328, %v326
    %v363 = vpack.c.b16 %v329, %v327
    %v364 = vpack.c.b16 %v332, %v330
    %v365 = vpack.c.b16 %v333, %v331
    %398 = vmatprep.subr.bf16.mxu0 %v335
    %399 = vmatpush1.bf16.msra.mxu0 %v334
    %400 = vmatprep.subr.bf16.mxu0 %v337
    %401 = vmatpush1.bf16.msra.mxu0 %v336
    %402 = vmatprep.subr.bf16.mxu0 %v339
    %403 = vmatpush1.bf16.msra.mxu0 %v338
    %404 = vmatprep.subr.bf16.mxu0 %v341
    %405 = vmatpush1.bf16.msra.mxu0 %v340
    %406 = vmatprep.subr.bf16.mxu0 %v343
    %407 = vmatpush1.bf16.msra.mxu0 %v342
    %408 = vmatprep.subr.bf16.mxu0 %v345
    %409 = vmatpush1.bf16.msra.mxu0 %v344
    %410 = vmatprep.subr.bf16.mxu0 %v347
    %411 = vmatpush1.bf16.msra.mxu0 %v346
    %412 = vmatprep.subr.bf16.mxu0 %v349
    %413 = vmatpush1.bf16.msra.mxu0 %v348
    %414 = vmatprep.subr.bf16.mxu0 %v351
    %415 = vmatpush1.bf16.msra.mxu0 %v350
    %416 = vmatprep.subr.bf16.mxu0 %v353
    %417 = vmatpush1.bf16.msra.mxu0 %v352
    %418 = vmatprep.subr.bf16.mxu0 %v355
    %419 = vmatpush1.bf16.msra.mxu0 %v354
    %420 = vmatprep.subr.bf16.mxu0 %v357
    %421 = vmatpush1.bf16.msra.mxu0 %v356
    %422 = vmatprep.subr.bf16.mxu0 %v359
    %423 = vmatpush1.bf16.msra.mxu0 %v358
    %424 = vmatprep.subr.bf16.mxu0 %v361
    %425 = vmatpush1.bf16.msra.mxu0 %v360
    %426 = vmatprep.subr.bf16.mxu0 %v363
    %427 = vmatpush1.bf16.msra.mxu0 %v362
    %428 = vmatprep.subr.bf16.mxu0 %v365
    %429 = vmatpush1.bf16.msra.mxu0 %v364
    %430 = vmatprep.mubr.bf16.mxu0 %v193
    %431 = vmatmul.mubr.bf16.gmra.mrb[0].mxu0 %v192
    %v432 = vpop.f32.mrb[0].mxu0
    %v433 = vadd.f32 %v231, %v432
    %v434 = vpop.f32.mrb[0].mxu0
    %v435 = vadd.f32 %v235, %v434
    %v436 = vpop.f32.mrb[0].mxu0
    %v437 = vadd.f32 %v231, %v436
    %v438 = vpop.f32.mrb[0].mxu0
    %v439 = vadd.f32 %v235, %v438
    %440 = vdwg.mxu0
    %v441 = vmax.f32 %v433, 0.0
    %v442 = vmax.f32 %v435, 0.0
    %v443 = vmax.f32 %v437, 0.0
    %v444 = vmax.f32 %v439, 0.0
    %v445 = vpack.c.bf16 %v443, %v441
    %v446 = vpack.c.bf16 %v444, %v442
    %v447 = vld [vmem:[%s5] sm:$0xff]
    %v448 = vld [vmem:[%s5 + $0x8] sm:$0xff]
    %v449 = vld [vmem:[%s5 + $0x10] sm:$0xff]
    %v450 = vld [vmem:[%s5 + $0x18] sm:$0xff]
    %v451 = vld [vmem:[%s5 + $0x20] sm:$0xff]
    %v452 = vld [vmem:[%s5 + $0x28] sm:$0xff]
    %v453 = vld [vmem:[%s5 + $0x30] sm:$0xff]
    %v454 = vld [vmem:[%s5 + $0x38] sm:$0xff]
    %v455 = vld [vmem:[%s5 + $0x40] sm:$0xff]
    %v456 = vld [vmem:[%s5 + $0x48] sm:$0xff]
    %v457 = vld [vmem:[%s5 + $0x50] sm:$0xff]
    %v458 = vld [vmem:[%s5 + $0x58] sm:$0xff]
    %v459 = vld [vmem:[%s5 + $0x60] sm:$0xff]
    %v460 = vld [vmem:[%s5 + $0x68] sm:$0xff]
    %v461 = vld [vmem:[%s5 + $0x70] sm:$0xff]
    %v462 = vld [vmem:[%s5 + $0x78] sm:$0xff]
    %v463 = vld [vmem:[%s5 + $0x80] sm:$0xff]
    %v464 = vld [vmem:[%s5 + $0x88] sm:$0xff]
    %v465 = vld [vmem:[%s5 + $0x90] sm:$0xff]
    %v466 = vld [vmem:[%s5 + $0x98] sm:$0xff]
    %v467 = vld [vmem:[%s5 + $0xa0] sm:$0xff]
    %v468 = vld [vmem:[%s5 + $0xa8] sm:$0xff]
    %v469 = vld [vmem:[%s5 + $0xb0] sm:$0xff]
    %v470 = vld [vmem:[%s5 + $0xb8] sm:$0xff]
    %v471 = vld [vmem:[%s5 + $0xc0] sm:$0xff]
    %v472 = vld [vmem:[%s5 + $0xc8] sm:$0xff]
    %v473 = vld [vmem:[%s5 + $0xd0] sm:$0xff]
    %v474 = vld [vmem:[%s5 + $0xd8] sm:$0xff]
    %v475 = vld [vmem:[%s5 + $0xe0] sm:$0xff]
    %v476 = vld [vmem:[%s5 + $0xe8] sm:$0xff]
    %v477 = vld [vmem:[%s5 + $0xf0] sm:$0xff]
    %v478 = vld [vmem:[%s5 + $0xf8] sm:$0xff]
    %v479 = vld [vmem:[%s6] sm:$0x3]
    %v481 = vlaneseq
    %v482 = vshrl.u32 %v481, 7
    %v483 = vsub.s32 0, %v482
    %v484 = vrot.slane %v479, %v483
    %v485 = vlaneseq
    %v486 = vshrl.u32 %v485, 7
    %v487 = vsub.s32 1, %v486
    %v488 = vrot.slane %v479, %v487
    %v523 = vunpack.c.l.b16 %v447
    %v524 = vunpack.c.h.b16 %v447
    %v525 = vunpack.c.l.b16 %v448
    %v526 = vunpack.c.h.b16 %v448
    %v527 = vunpack.c.l.b16 %v449
    %v528 = vunpack.c.h.b16 %v449
    %v529 = vunpack.c.l.b16 %v450
    %v530 = vunpack.c.h.b16 %v450
    %v531 = vunpack.c.l.b16 %v451
    %v532 = vunpack.c.h.b16 %v451
    %v533 = vunpack.c.l.b16 %v452
    %v534 = vunpack.c.h.b16 %v452
    %v535 = vunpack.c.l.b16 %v453
    %v536 = vunpack.c.h.b16 %v453
    %v537 = vunpack.c.l.b16 %v454
    %v538 = vunpack.c.h.b16 %v454
    %v539 = vunpack.c.l.b16 %v455
    %v540 = vunpack.c.h.b16 %v455
    %v541 = vunpack.c.l.b16 %v456
    %v542 = vunpack.c.h.b16 %v456
    %v543 = vunpack.c.l.b16 %v457
    %v544 = vunpack.c.h.b16 %v457
    %v545 = vunpack.c.l.b16 %v458
    %v546 = vunpack.c.h.b16 %v458
    %v547 = vunpack.c.l.b16 %v459
    %v548 = vunpack.c.h.b16 %v459
    %v549 = vunpack.c.l.b16 %v460
    %v550 = vunpack.c.h.b16 %v460
    %v551 = vunpack.c.l.b16 %v461
    %v552 = vunpack.c.h.b16 %v461
    %v553 = vunpack.c.l.b16 %v462
    %v554 = vunpack.c.h.b16 %v462
    %v555 = vunpack.c.l.b16 %v463
    %v556 = vunpack.c.h.b16 %v463
    %v557 = vunpack.c.l.b16 %v464
    %v558 = vunpack.c.h.b16 %v464
    %v559 = vunpack.c.l.b16 %v465
    %v560 = vunpack.c.h.b16 %v465
    %v561 = vunpack.c.l.b16 %v466
    %v562 = vunpack.c.h.b16 %v466
    %v563 = vunpack.c.l.b16 %v467
    %v564 = vunpack.c.h.b16 %v467
    %v565 = vunpack.c.l.b16 %v468
    %v566 = vunpack.c.h.b16 %v468
    %v567 = vunpack.c.l.b16 %v469
    %v568 = vunpack.c.h.b16 %v469
    %v569 = vunpack.c.l.b16 %v470
    %v570 = vunpack.c.h.b16 %v470
    %v571 = vunpack.c.l.b16 %v471
    %v572 = vunpack.c.h.b16 %v471
    %v573 = vunpack.c.l.b16 %v472
    %v574 = vunpack.c.h.b16 %v472
    %v575 = vunpack.c.l.b16 %v473
    %v576 = vunpack.c.h.b16 %v473
    %v577 = vunpack.c.l.b16 %v474
    %v578 = vunpack.c.h.b16 %v474
    %v579 = vunpack.c.l.b16 %v475
    %v580 = vunpack.c.h.b16 %v475
    %v581 = vunpack.c.l.b16 %v476
    %v582 = vunpack.c.h.b16 %v476
    %v583 = vunpack.c.l.b16 %v477
    %v584 = vunpack.c.h.b16 %v477
    %v585 = vunpack.c.l.b16 %v478
    %v586 = vunpack.c.h.b16 %v478
    %v587 = vpack.c.b16 %v525, %v523
    %v588 = vpack.c.b16 %v526, %v524
    %v589 = vpack.c.b16 %v529, %v527
    %v590 = vpack.c.b16 %v530, %v528
    %v591 = vpack.c.b16 %v533, %v531
    %v592 = vpack.c.b16 %v534, %v532
    %v593 = vpack.c.b16 %v537, %v535
    %v594 = vpack.c.b16 %v538, %v536
    %v595 = vpack.c.b16 %v541, %v539
    %v596 = vpack.c.b16 %v542, %v540
    %v597 = vpack.c.b16 %v545, %v543
    %v598 = vpack.c.b16 %v546, %v544
    %v599 = vpack.c.b16 %v549, %v547
    %v600 = vpack.c.b16 %v550, %v548
    %v601 = vpack.c.b16 %v553, %v551
    %v602 = vpack.c.b16 %v554, %v552
    %v603 = vpack.c.b16 %v557, %v555
    %v604 = vpack.c.b16 %v558, %v556
    %v605 = vpack.c.b16 %v561, %v559
    %v606 = vpack.c.b16 %v562, %v560
    %v607 = vpack.c.b16 %v565, %v563
    %v608 = vpack.c.b16 %v566, %v564
    %v609 = vpack.c.b16 %v569, %v567
    %v610 = vpack.c.b16 %v570, %v568
    %v611 = vpack.c.b16 %v573, %v571
    %v612 = vpack.c.b16 %v574, %v572
    %v613 = vpack.c.b16 %v577, %v575
    %v614 = vpack.c.b16 %v578, %v576
    %v615 = vpack.c.b16 %v581, %v579
    %v616 = vpack.c.b16 %v582, %v580
    %v617 = vpack.c.b16 %v585, %v583
    %v618 = vpack.c.b16 %v586, %v584
    %651 = vmatprep.subr.bf16.mxu0 %v588
    %652 = vmatpush1.bf16.msra.mxu0 %v587
    %653 = vmatprep.subr.bf16.mxu0 %v590
    %654 = vmatpush1.bf16.msra.mxu0 %v589
    %655 = vmatprep.subr.bf16.mxu0 %v592
    %656 = vmatpush1.bf16.msra.mxu0 %v591
    %657 = vmatprep.subr.bf16.mxu0 %v594
    %658 = vmatpush1.bf16.msra.mxu0 %v593
    %659 = vmatprep.subr.bf16.mxu0 %v596
    %660 = vmatpush1.bf16.msra.mxu0 %v595
    %661 = vmatprep.subr.bf16.mxu0 %v598
    %662 = vmatpush1.bf16.msra.mxu0 %v597
    %663 = vmatprep.subr.bf16.mxu0 %v600
    %664 = vmatpush1.bf16.msra.mxu0 %v599
    %665 = vmatprep.subr.bf16.mxu0 %v602
    %666 = vmatpush1.bf16.msra.mxu0 %v601
    %667 = vmatprep.subr.bf16.mxu0 %v604
    %668 = vmatpush1.bf16.msra.mxu0 %v603
    %669 = vmatprep.subr.bf16.mxu0 %v606
    %670 = vmatpush1.bf16.msra.mxu0 %v605
    %671 = vmatprep.subr.bf16.mxu0 %v608
    %672 = vmatpush1.bf16.msra.mxu0 %v607
    %673 = vmatprep.subr.bf16.mxu0 %v610
    %674 = vmatpush1.bf16.msra.mxu0 %v609
    %675 = vmatprep.subr.bf16.mxu0 %v612
    %676 = vmatpush1.bf16.msra.mxu0 %v611
    %677 = vmatprep.subr.bf16.mxu0 %v614
    %678 = vmatpush1.bf16.msra.mxu0 %v613
    %679 = vmatprep.subr.bf16.mxu0 %v616
    %680 = vmatpush1.bf16.msra.mxu0 %v615
    %681 = vmatprep.subr.bf16.mxu0 %v618
    %682 = vmatpush1.bf16.msra.mxu0 %v617
    %683 = vmatprep.mubr.bf16.mxu0 %v446
    %684 = vmatmul.mubr.bf16.gmra.mrb[0].mxu0 %v445
    %v685 = vpop.f32.mrb[0].mxu0
    %v686 = vadd.f32 %v484, %v685
    %v687 = vpop.f32.mrb[0].mxu0
    %v688 = vadd.f32 %v488, %v687
    %v689 = vpop.f32.mrb[0].mxu0
    %v690 = vadd.f32 %v484, %v689
    %v691 = vpop.f32.mrb[0].mxu0
    %v692 = vadd.f32 %v488, %v691
    %693 = vdwg.mxu0
    %v694 = vmax.f32 %v686, 0.0
    %v695 = vmax.f32 %v688, 0.0
    %v696 = vmax.f32 %v690, 0.0
    %v697 = vmax.f32 %v692, 0.0
    %v698 = vpack.c.bf16 %v696, %v694
    %v699 = vpack.c.bf16 %v697, %v695
    %v700 = vld [vmem:[%s7] sm:$0xff]
    %v701 = vld [vmem:[%s7 + $0x8] sm:$0xff]
    %v702 = vld [vmem:[%s7 + $0x10] sm:$0xff]
    %v703 = vld [vmem:[%s7 + $0x18] sm:$0xf]
    %v704 = vld [vmem:[%s7 + $0x1c] sm:$0xff]
    %v705 = vld [vmem:[%s7 + $0x24] sm:$0xff]
    %v706 = vld [vmem:[%s7 + $0x2c] sm:$0xff]
    %v707 = vld [vmem:[%s7 + $0x34] sm:$0xf]
    %v708 = vld [vmem:[%s7 + $0x38] sm:$0xff]
    %v709 = vld [vmem:[%s7 + $0x40] sm:$0xff]
    %v710 = vld [vmem:[%s7 + $0x48] sm:$0xff]
    %v711 = vld [vmem:[%s7 + $0x50] sm:$0xf]
    %v712 = vld [vmem:[%s7 + $0x54] sm:$0xff]
    %v713 = vld [vmem:[%s7 + $0x5c] sm:$0xff]
    %v714 = vld [vmem:[%s7 + $0x64] sm:$0xff]
    %v715 = vld [vmem:[%s7 + $0x6c] sm:$0xf]
    %v716 = vld [vmem:[%s7 + $0x70] sm:$0xff]
    %v717 = vld [vmem:[%s7 + $0x78] sm:$0xff]
    %v718 = vld [vmem:[%s7 + $0x80] sm:$0xff]
    %v719 = vld [vmem:[%s7 + $0x88] sm:$0xf]
    %v720 = vld [vmem:[%s7 + $0x8c] sm:$0xff]
    %v721 = vld [vmem:[%s7 + $0x94] sm:$0xff]
    %v722 = vld [vmem:[%s7 + $0x9c] sm:$0xff]
    %v723 = vld [vmem:[%s7 + $0xa4] sm:$0xf]
    %v724 = vld [vmem:[%s7 + $0xa8] sm:$0xff]
    %v725 = vld [vmem:[%s7 + $0xb0] sm:$0xff]
    %v726 = vld [vmem:[%s7 + $0xb8] sm:$0xff]
    %v727 = vld [vmem:[%s7 + $0xc0] sm:$0xf]
    %v728 = vld [vmem:[%s7 + $0xc4] sm:$0xff]
    %v729 = vld [vmem:[%s7 + $0xcc] sm:$0xff]
    %v730 = vld [vmem:[%s7 + $0xd4] sm:$0xff]
    %v731 = vld [vmem:[%s7 + $0xdc] sm:$0xf]
    %v732 = vld [vmem:[%s7 + $0xe0] sm:$0xff]
    %v733 = vld [vmem:[%s7 + $0xe8] sm:$0xff]
    %v734 = vld [vmem:[%s7 + $0xf0] sm:$0xff]
    %v735 = vld [vmem:[%s7 + $0xf8] sm:$0xf]
    %v736 = vld [vmem:[%s7 + $0xfc] sm:$0xff]
    %v737 = vld [vmem:[%s7 + $0x104] sm:$0xff]
    %v738 = vld [vmem:[%s7 + $0x10c] sm:$0xff]
    %v739 = vld [vmem:[%s7 + $0x114] sm:$0xf]
    %v740 = vld [vmem:[%s7 + $0x118] sm:$0xff]
    %v741 = vld [vmem:[%s7 + $0x120] sm:$0xff]
    %v742 = vld [vmem:[%s7 + $0x128] sm:$0xff]
    %v743 = vld [vmem:[%s7 + $0x130] sm:$0xf]
    %v744 = vld [vmem:[%s7 + $0x134] sm:$0xff]
    %v745 = vld [vmem:[%s7 + $0x13c] sm:$0xff]
    %v746 = vld [vmem:[%s7 + $0x144] sm:$0xff]
    %v747 = vld [vmem:[%s7 + $0x14c] sm:$0xf]
    %v748 = vld [vmem:[%s7 + $0x150] sm:$0xff]
    %v749 = vld [vmem:[%s7 + $0x158] sm:$0xff]
    %v750 = vld [vmem:[%s7 + $0x160] sm:$0xff]
    %v751 = vld [vmem:[%s7 + $0x168] sm:$0xf]
    %v752 = vld [vmem:[%s7 + $0x16c] sm:$0xff]
    %v753 = vld [vmem:[%s7 + $0x174] sm:$0xff]
    %v754 = vld [vmem:[%s7 + $0x17c] sm:$0xff]
    %v755 = vld [vmem:[%s7 + $0x184] sm:$0xf]
    %v756 = vld [vmem:[%s7 + $0x188] sm:$0xff]
    %v757 = vld [vmem:[%s7 + $0x190] sm:$0xff]
    %v758 = vld [vmem:[%s7 + $0x198] sm:$0xff]
    %v759 = vld [vmem:[%s7 + $0x1a0] sm:$0xf]
    %v760 = vld [vmem:[%s7 + $0x1a4] sm:$0xff]
    %v761 = vld [vmem:[%s7 + $0x1ac] sm:$0xff]
    %v762 = vld [vmem:[%s7 + $0x1b4] sm:$0xff]
    %v763 = vld [vmem:[%s7 + $0x1bc] sm:$0xf]
    %v764 = vld [vmem:[%s7 + $0x1c0] sm:$0xff]
    %v765 = vld [vmem:[%s7 + $0x1c8] sm:$0xff]
    %v766 = vld [vmem:[%s7 + $0x1d0] sm:$0xff]
    %v767 = vld [vmem:[%s7 + $0x1d8] sm:$0xf]
    %v768 = vld [vmem:[%s7 + $0x1dc] sm:$0xff]
    %v769 = vld [vmem:[%s7 + $0x1e4] sm:$0xff]
    %v770 = vld [vmem:[%s7 + $0x1ec] sm:$0xff]
    %v771 = vld [vmem:[%s7 + $0x1f4] sm:$0xf]
    %v772 = vld [vmem:[%s7 + $0x1f8] sm:$0xff]
    %v773 = vld [vmem:[%s7 + $0x200] sm:$0xff]
    %v774 = vld [vmem:[%s7 + $0x208] sm:$0xff]
    %v775 = vld [vmem:[%s7 + $0x210] sm:$0xf]
    %v776 = vld [vmem:[%s7 + $0x214] sm:$0xff]
    %v777 = vld [vmem:[%s7 + $0x21c] sm:$0xff]
    %v778 = vld [vmem:[%s7 + $0x224] sm:$0xff]
    %v779 = vld [vmem:[%s7 + $0x22c] sm:$0xf]
    %v780 = vld [vmem:[%s7 + $0x230] sm:$0xff]
    %v781 = vld [vmem:[%s7 + $0x238] sm:$0xff]
    %v782 = vld [vmem:[%s7 + $0x240] sm:$0xff]
    %v783 = vld [vmem:[%s7 + $0x248] sm:$0xf]
    %v784 = vld [vmem:[%s7 + $0x24c] sm:$0xff]
    %v785 = vld [vmem:[%s7 + $0x254] sm:$0xff]
    %v786 = vld [vmem:[%s7 + $0x25c] sm:$0xff]
    %v787 = vld [vmem:[%s7 + $0x264] sm:$0xf]
    %v788 = vld [vmem:[%s7 + $0x268] sm:$0xff]
    %v789 = vld [vmem:[%s7 + $0x270] sm:$0xff]
    %v790 = vld [vmem:[%s7 + $0x278] sm:$0xff]
    %v791 = vld [vmem:[%s7 + $0x280] sm:$0xf]
    %v792 = vld [vmem:[%s7 + $0x284] sm:$0xff]
    %v793 = vld [vmem:[%s7 + $0x28c] sm:$0xff]
    %v794 = vld [vmem:[%s7 + $0x294] sm:$0xff]
    %v795 = vld [vmem:[%s7 + $0x29c] sm:$0xf]
    %v796 = vld [vmem:[%s7 + $0x2a0] sm:$0xff]
    %v797 = vld [vmem:[%s7 + $0x2a8] sm:$0xff]
    %v798 = vld [vmem:[%s7 + $0x2b0] sm:$0xff]
    %v799 = vld [vmem:[%s7 + $0x2b8] sm:$0xf]
    %v800 = vld [vmem:[%s7 + $0x2bc] sm:$0xff]
    %v801 = vld [vmem:[%s7 + $0x2c4] sm:$0xff]
    %v802 = vld [vmem:[%s7 + $0x2cc] sm:$0xff]
    %v803 = vld [vmem:[%s7 + $0x2d4] sm:$0xf]
    %v804 = vld [vmem:[%s7 + $0x2d8] sm:$0xff]
    %v805 = vld [vmem:[%s7 + $0x2e0] sm:$0xff]
    %v806 = vld [vmem:[%s7 + $0x2e8] sm:$0xff]
    %v807 = vld [vmem:[%s7 + $0x2f0] sm:$0xf]
    %v808 = vld [vmem:[%s7 + $0x2f4] sm:$0xff]
    %v809 = vld [vmem:[%s7 + $0x2fc] sm:$0xff]
    %v810 = vld [vmem:[%s7 + $0x304] sm:$0xff]
    %v811 = vld [vmem:[%s7 + $0x30c] sm:$0xf]
    %v812 = vld [vmem:[%s7 + $0x310] sm:$0xff]
    %v813 = vld [vmem:[%s7 + $0x318] sm:$0xff]
    %v814 = vld [vmem:[%s7 + $0x320] sm:$0xff]
    %v815 = vld [vmem:[%s7 + $0x328] sm:$0xf]
    %v816 = vld [vmem:[%s7 + $0x32c] sm:$0xff]
    %v817 = vld [vmem:[%s7 + $0x334] sm:$0xff]
    %v818 = vld [vmem:[%s7 + $0x33c] sm:$0xff]
    %v819 = vld [vmem:[%s7 + $0x344] sm:$0xf]
    %v820 = vld [vmem:[%s7 + $0x348] sm:$0xff]
    %v821 = vld [vmem:[%s7 + $0x350] sm:$0xff]
    %v822 = vld [vmem:[%s7 + $0x358] sm:$0xff]
    %v823 = vld [vmem:[%s7 + $0x360] sm:$0xf]
    %v824 = vld [vmem:[%s7 + $0x364] sm:$0xff]
    %v825 = vld [vmem:[%s7 + $0x36c] sm:$0xff]
    %v826 = vld [vmem:[%s7 + $0x374] sm:$0xff]
    %v827 = vld [vmem:[%s7 + $0x37c] sm:$0xf]
    %v828 = vld [vmem:[%s8] sm:$0x7f]
    %v830 = vlaneseq
    %v831 = vshrl.u32 %v830, 7
    %v832 = vsub.s32 0, %v831
    %v833 = vrot.slane %v828, %v832
    %v834 = vlaneseq
    %v835 = vshrl.u32 %v834, 7
    %v836 = vsub.s32 1, %v835
    %v837 = vrot.slane %v828, %v836
    %v838 = vlaneseq
    %v839 = vshrl.u32 %v838, 7
    %v840 = vsub.s32 2, %v839
    %v841 = vrot.slane %v828, %v840
    %v842 = vlaneseq
    %v843 = vshrl.u32 %v842, 7
    %v844 = vsub.s32 3, %v843
    %v845 = vrot.slane %v828, %v844
    %v846 = vlaneseq
    %v847 = vshrl.u32 %v846, 7
    %v848 = vsub.s32 4, %v847
    %v849 = vrot.slane %v828, %v848
    %v850 = vlaneseq
    %v851 = vshrl.u32 %v850, 7
    %v852 = vsub.s32 5, %v851
    %v853 = vrot.slane %v828, %v852
    %v854 = vlaneseq
    %v855 = vshrl.u32 %v854, 7
    %v856 = vsub.s32 6, %v855
    %v857 = vrot.slane %v828, %v856
    %v993 = vunpack.c.l.b16 %v700
    %v994 = vunpack.c.h.b16 %v700
    %v995 = vunpack.c.l.b16 %v701
    %v996 = vunpack.c.h.b16 %v701
    %v997 = vunpack.c.l.b16 %v702
    %v998 = vunpack.c.h.b16 %v702
    %v999 = vunpack.c.l.b16 %v703
    %v1000 = vunpack.c.l.b16 %v704
    %v1001 = vunpack.c.h.b16 %v704
    %v1002 = vunpack.c.l.b16 %v705
    %v1003 = vunpack.c.h.b16 %v705
    %v1004 = vunpack.c.l.b16 %v706
    %v1005 = vunpack.c.h.b16 %v706
    %v1006 = vunpack.c.l.b16 %v707
    %v1007 = vunpack.c.l.b16 %v708
    %v1008 = vunpack.c.h.b16 %v708
    %v1009 = vunpack.c.l.b16 %v709
    %v1010 = vunpack.c.h.b16 %v709
    %v1011 = vunpack.c.l.b16 %v710
    %v1012 = vunpack.c.h.b16 %v710
    %v1013 = vunpack.c.l.b16 %v711
    %v1014 = vunpack.c.l.b16 %v712
    %v1015 = vunpack.c.h.b16 %v712
    %v1016 = vunpack.c.l.b16 %v713
    %v1017 = vunpack.c.h.b16 %v713
    %v1018 = vunpack.c.l.b16 %v714
    %v1019 = vunpack.c.h.b16 %v714
    %v1020 = vunpack.c.l.b16 %v715
    %v1021 = vunpack.c.l.b16 %v716
    %v1022 = vunpack.c.h.b16 %v716
    %v1023 = vunpack.c.l.b16 %v717
    %v1024 = vunpack.c.h.b16 %v717
    %v1025 = vunpack.c.l.b16 %v718
    %v1026 = vunpack.c.h.b16 %v718
    %v1027 = vunpack.c.l.b16 %v719
    %v1028 = vunpack.c.l.b16 %v720
    %v1029 = vunpack.c.h.b16 %v720
    %v1030 = vunpack.c.l.b16 %v721
    %v1031 = vunpack.c.h.b16 %v721
    %v1032 = vunpack.c.l.b16 %v722
    %v1033 = vunpack.c.h.b16 %v722
    %v1034 = vunpack.c.l.b16 %v723
    %v1035 = vunpack.c.l.b16 %v724
    %v1036 = vunpack.c.h.b16 %v724
    %v1037 = vunpack.c.l.b16 %v725
    %v1038 = vunpack.c.h.b16 %v725
    %v1039 = vunpack.c.l.b16 %v726
    %v1040 = vunpack.c.h.b16 %v726
    %v1041 = vunpack.c.l.b16 %v727
    %v1042 = vunpack.c.l.b16 %v728
    %v1043 = vunpack.c.h.b16 %v728
    %v1044 = vunpack.c.l.b16 %v729
    %v1045 = vunpack.c.h.b16 %v729
    %v1046 = vunpack.c.l.b16 %v730
    %v1047 = vunpack.c.h.b16 %v730
    %v1048 = vunpack.c.l.b16 %v731
    %v1049 = vunpack.c.l.b16 %v732
    %v1050 = vunpack.c.h.b16 %v732
    %v1051 = vunpack.c.l.b16 %v733
    %v1052 = vunpack.c.h.b16 %v733
    %v1053 = vunpack.c.l.b16 %v734
    %v1054 = vunpack.c.h.b16 %v734
    %v1055 = vunpack.c.l.b16 %v735
    %v1056 = vunpack.c.l.b16 %v736
    %v1057 = vunpack.c.h.b16 %v736
    %v1058 = vunpack.c.l.b16 %v737
    %v1059 = vunpack.c.h.b16 %v737
    %v1060 = vunpack.c.l.b16 %v738
    %v1061 = vunpack.c.h.b16 %v738
    %v1062 = vunpack.c.l.b16 %v739
    %v1063 = vunpack.c.l.b16 %v740
    %v1064 = vunpack.c.h.b16 %v740
    %v1065 = vunpack.c.l.b16 %v741
    %v1066 = vunpack.c.h.b16 %v741
    %v1067 = vunpack.c.l.b16 %v742
    %v1068 = vunpack.c.h.b16 %v742
    %v1069 = vunpack.c.l.b16 %v743
    %v1070 = vunpack.c.l.b16 %v744
    %v1071 = vunpack.c.h.b16 %v744
    %v1072 = vunpack.c.l.b16 %v745
    %v1073 = vunpack.c.h.b16 %v745
    %v1074 = vunpack.c.l.b16 %v746
    %v1075 = vunpack.c.h.b16 %v746
    %v1076 = vunpack.c.l.b16 %v747
    %v1077 = vunpack.c.l.b16 %v748
    %v1078 = vunpack.c.h.b16 %v748
    %v1079 = vunpack.c.l.b16 %v749
    %v1080 = vunpack.c.h.b16 %v749
    %v1081 = vunpack.c.l.b16 %v750
    %v1082 = vunpack.c.h.b16 %v750
    %v1083 = vunpack.c.l.b16 %v751
    %v1084 = vunpack.c.l.b16 %v752
    %v1085 = vunpack.c.h.b16 %v752
    %v1086 = vunpack.c.l.b16 %v753
    %v1087 = vunpack.c.h.b16 %v753
    %v1088 = vunpack.c.l.b16 %v754
    %v1089 = vunpack.c.h.b16 %v754
    %v1090 = vunpack.c.l.b16 %v755
    %v1091 = vunpack.c.l.b16 %v756
    %v1092 = vunpack.c.h.b16 %v756
    %v1093 = vunpack.c.l.b16 %v757
    %v1094 = vunpack.c.h.b16 %v757
    %v1095 = vunpack.c.l.b16 %v758
    %v1096 = vunpack.c.h.b16 %v758
    %v1097 = vunpack.c.l.b16 %v759
    %v1098 = vunpack.c.l.b16 %v760
    %v1099 = vunpack.c.h.b16 %v760
    %v1100 = vunpack.c.l.b16 %v761
    %v1101 = vunpack.c.h.b16 %v761
    %v1102 = vunpack.c.l.b16 %v762
    %v1103 = vunpack.c.h.b16 %v762
    %v1104 = vunpack.c.l.b16 %v763
    %v1105 = vunpack.c.l.b16 %v764
    %v1106 = vunpack.c.h.b16 %v764
    %v1107 = vunpack.c.l.b16 %v765
    %v1108 = vunpack.c.h.b16 %v765
    %v1109 = vunpack.c.l.b16 %v766
    %v1110 = vunpack.c.h.b16 %v766
    %v1111 = vunpack.c.l.b16 %v767
    %v1112 = vunpack.c.l.b16 %v768
    %v1113 = vunpack.c.h.b16 %v768
    %v1114 = vunpack.c.l.b16 %v769
    %v1115 = vunpack.c.h.b16 %v769
    %v1116 = vunpack.c.l.b16 %v770
    %v1117 = vunpack.c.h.b16 %v770
    %v1118 = vunpack.c.l.b16 %v771
    %v1119 = vunpack.c.l.b16 %v772
    %v1120 = vunpack.c.h.b16 %v772
    %v1121 = vunpack.c.l.b16 %v773
    %v1122 = vunpack.c.h.b16 %v773
    %v1123 = vunpack.c.l.b16 %v774
    %v1124 = vunpack.c.h.b16 %v774
    %v1125 = vunpack.c.l.b16 %v775
    %v1126 = vunpack.c.l.b16 %v776
    %v1127 = vunpack.c.h.b16 %v776
    %v1128 = vunpack.c.l.b16 %v777
    %v1129 = vunpack.c.h.b16 %v777
    %v1130 = vunpack.c.l.b16 %v778
    %v1131 = vunpack.c.h.b16 %v778
    %v1132 = vunpack.c.l.b16 %v779
    %v1133 = vunpack.c.l.b16 %v780
    %v1134 = vunpack.c.h.b16 %v780
    %v1135 = vunpack.c.l.b16 %v781
    %v1136 = vunpack.c.h.b16 %v781
    %v1137 = vunpack.c.l.b16 %v782
    %v1138 = vunpack.c.h.b16 %v782
    %v1139 = vunpack.c.l.b16 %v783
    %v1140 = vunpack.c.l.b16 %v784
    %v1141 = vunpack.c.h.b16 %v784
    %v1142 = vunpack.c.l.b16 %v785
    %v1143 = vunpack.c.h.b16 %v785
    %v1144 = vunpack.c.l.b16 %v786
    %v1145 = vunpack.c.h.b16 %v786
    %v1146 = vunpack.c.l.b16 %v787
    %v1147 = vunpack.c.l.b16 %v788
    %v1148 = vunpack.c.h.b16 %v788
    %v1149 = vunpack.c.l.b16 %v789
    %v1150 = vunpack.c.h.b16 %v789
    %v1151 = vunpack.c.l.b16 %v790
    %v1152 = vunpack.c.h.b16 %v790
    %v1153 = vunpack.c.l.b16 %v791
    %v1154 = vunpack.c.l.b16 %v792
    %v1155 = vunpack.c.h.b16 %v792
    %v1156 = vunpack.c.l.b16 %v793
    %v1157 = vunpack.c.h.b16 %v793
    %v1158 = vunpack.c.l.b16 %v794
    %v1159 = vunpack.c.h.b16 %v794
    %v1160 = vunpack.c.l.b16 %v795
    %v1161 = vunpack.c.l.b16 %v796
    %v1162 = vunpack.c.h.b16 %v796
    %v1163 = vunpack.c.l.b16 %v797
    %v1164 = vunpack.c.h.b16 %v797
    %v1165 = vunpack.c.l.b16 %v798
    %v1166 = vunpack.c.h.b16 %v798
    %v1167 = vunpack.c.l.b16 %v799
    %v1168 = vunpack.c.l.b16 %v800
    %v1169 = vunpack.c.h.b16 %v800
    %v1170 = vunpack.c.l.b16 %v801
    %v1171 = vunpack.c.h.b16 %v801
    %v1172 = vunpack.c.l.b16 %v802
    %v1173 = vunpack.c.h.b16 %v802
    %v1174 = vunpack.c.l.b16 %v803
    %v1175 = vunpack.c.l.b16 %v804
    %v1176 = vunpack.c.h.b16 %v804
    %v1177 = vunpack.c.l.b16 %v805
    %v1178 = vunpack.c.h.b16 %v805
    %v1179 = vunpack.c.l.b16 %v806
    %v1180 = vunpack.c.h.b16 %v806
    %v1181 = vunpack.c.l.b16 %v807
    %v1182 = vunpack.c.l.b16 %v808
    %v1183 = vunpack.c.h.b16 %v808
    %v1184 = vunpack.c.l.b16 %v809
    %v1185 = vunpack.c.h.b16 %v809
    %v1186 = vunpack.c.l.b16 %v810
    %v1187 = vunpack.c.h.b16 %v810
    %v1188 = vunpack.c.l.b16 %v811
    %v1189 = vunpack.c.l.b16 %v812
    %v1190 = vunpack.c.h.b16 %v812
    %v1191 = vunpack.c.l.b16 %v813
    %v1192 = vunpack.c.h.b16 %v813
    %v1193 = vunpack.c.l.b16 %v814
    %v1194 = vunpack.c.h.b16 %v814
    %v1195 = vunpack.c.l.b16 %v815
    %v1196 = vunpack.c.l.b16 %v816
    %v1197 = vunpack.c.h.b16 %v816
    %v1198 = vunpack.c.l.b16 %v817
    %v1199 = vunpack.c.h.b16 %v817
    %v1200 = vunpack.c.l.b16 %v818
    %v1201 = vunpack.c.h.b16 %v818
    %v1202 = vunpack.c.l.b16 %v819
    %v1203 = vunpack.c.l.b16 %v820
    %v1204 = vunpack.c.h.b16 %v820
    %v1205 = vunpack.c.l.b16 %v821
    %v1206 = vunpack.c.h.b16 %v821
    %v1207 = vunpack.c.l.b16 %v822
    %v1208 = vunpack.c.h.b16 %v822
    %v1209 = vunpack.c.l.b16 %v823
    %v1210 = vunpack.c.l.b16 %v824
    %v1211 = vunpack.c.h.b16 %v824
    %v1212 = vunpack.c.l.b16 %v825
    %v1213 = vunpack.c.h.b16 %v825
    %v1214 = vunpack.c.l.b16 %v826
    %v1215 = vunpack.c.h.b16 %v826
    %v1216 = vunpack.c.l.b16 %v827
    %v1217 = vpack.c.b16 %v1000, %v993
    %v1218 = vpack.c.b16 %v1001, %v994
    %v1219 = vpack.c.b16 %v1002, %v995
    %v1220 = vpack.c.b16 %v1003, %v996
    %v1221 = vpack.c.b16 %v1004, %v997
    %v1222 = vpack.c.b16 %v1005, %v998
    %v1223 = vpack.c.b16 %v1006, %v999
    %v1224 = vpack.c.b16 %v1014, %v1007
    %v1225 = vpack.c.b16 %v1015, %v1008
    %v1226 = vpack.c.b16 %v1016, %v1009
    %v1227 = vpack.c.b16 %v1017, %v1010
    %v1228 = vpack.c.b16 %v1018, %v1011
    %v1229 = vpack.c.b16 %v1019, %v1012
    %v1230 = vpack.c.b16 %v1020, %v1013
    %v1231 = vpack.c.b16 %v1028, %v1021
    %v1232 = vpack.c.b16 %v1029, %v1022
    %v1233 = vpack.c.b16 %v1030, %v1023
    %v1234 = vpack.c.b16 %v1031, %v1024
    %v1235 = vpack.c.b16 %v1032, %v1025
    %v1236 = vpack.c.b16 %v1033, %v1026
    %v1237 = vpack.c.b16 %v1034, %v1027
    %v1238 = vpack.c.b16 %v1042, %v1035
    %v1239 = vpack.c.b16 %v1043, %v1036
    %v1240 = vpack.c.b16 %v1044, %v1037
    %v1241 = vpack.c.b16 %v1045, %v1038
    %v1242 = vpack.c.b16 %v1046, %v1039
    %v1243 = vpack.c.b16 %v1047, %v1040
    %v1244 = vpack.c.b16 %v1048, %v1041
    %v1245 = vpack.c.b16 %v1056, %v1049
    %v1246 = vpack.c.b16 %v1057, %v1050
    %v1247 = vpack.c.b16 %v1058, %v1051
    %v1248 = vpack.c.b16 %v1059, %v1052
    %v1249 = vpack.c.b16 %v1060, %v1053
    %v1250 = vpack.c.b16 %v1061, %v1054
    %v1251 = vpack.c.b16 %v1062, %v1055
    %v1252 = vpack.c.b16 %v1070, %v1063
    %v1253 = vpack.c.b16 %v1071, %v1064
    %v1254 = vpack.c.b16 %v1072, %v1065
    %v1255 = vpack.c.b16 %v1073, %v1066
    %v1256 = vpack.c.b16 %v1074, %v1067
    %v1257 = vpack.c.b16 %v1075, %v1068
    %v1258 = vpack.c.b16 %v1076, %v1069
    %v1259 = vpack.c.b16 %v1084, %v1077
    %v1260 = vpack.c.b16 %v1085, %v1078
    %v1261 = vpack.c.b16 %v1086, %v1079
    %v1262 = vpack.c.b16 %v1087, %v1080
    %v1263 = vpack.c.b16 %v1088, %v1081
    %v1264 = vpack.c.b16 %v1089, %v1082
    %v1265 = vpack.c.b16 %v1090, %v1083
    %v1266 = vpack.c.b16 %v1098, %v1091
    %v1267 = vpack.c.b16 %v1099, %v1092
    %v1268 = vpack.c.b16 %v1100, %v1093
    %v1269 = vpack.c.b16 %v1101, %v1094
    %v1270 = vpack.c.b16 %v1102, %v1095
    %v1271 = vpack.c.b16 %v1103, %v1096
    %v1272 = vpack.c.b16 %v1104, %v1097
    %v1273 = vpack.c.b16 %v1112, %v1105
    %v1274 = vpack.c.b16 %v1113, %v1106
    %v1275 = vpack.c.b16 %v1114, %v1107
    %v1276 = vpack.c.b16 %v1115, %v1108
    %v1277 = vpack.c.b16 %v1116, %v1109
    %v1278 = vpack.c.b16 %v1117, %v1110
    %v1279 = vpack.c.b16 %v1118, %v1111
    %v1280 = vpack.c.b16 %v1126, %v1119
    %v1281 = vpack.c.b16 %v1127, %v1120
    %v1282 = vpack.c.b16 %v1128, %v1121
    %v1283 = vpack.c.b16 %v1129, %v1122
    %v1284 = vpack.c.b16 %v1130, %v1123
    %v1285 = vpack.c.b16 %v1131, %v1124
    %v1286 = vpack.c.b16 %v1132, %v1125
    %v1287 = vpack.c.b16 %v1140, %v1133
    %v1288 = vpack.c.b16 %v1141, %v1134
    %v1289 = vpack.c.b16 %v1142, %v1135
    %v1290 = vpack.c.b16 %v1143, %v1136
    %v1291 = vpack.c.b16 %v1144, %v1137
    %v1292 = vpack.c.b16 %v1145, %v1138
    %v1293 = vpack.c.b16 %v1146, %v1139
    %v1294 = vpack.c.b16 %v1154, %v1147
    %v1295 = vpack.c.b16 %v1155, %v1148
    %v1296 = vpack.c.b16 %v1156, %v1149
    %v1297 = vpack.c.b16 %v1157, %v1150
    %v1298 = vpack.c.b16 %v1158, %v1151
    %v1299 = vpack.c.b16 %v1159, %v1152
    %v1300 = vpack.c.b16 %v1160, %v1153
    %v1301 = vpack.c.b16 %v1168, %v1161
    %v1302 = vpack.c.b16 %v1169, %v1162
    %v1303 = vpack.c.b16 %v1170, %v1163
    %v1304 = vpack.c.b16 %v1171, %v1164
    %v1305 = vpack.c.b16 %v1172, %v1165
    %v1306 = vpack.c.b16 %v1173, %v1166
    %v1307 = vpack.c.b16 %v1174, %v1167
    %v1308 = vpack.c.b16 %v1182, %v1175
    %v1309 = vpack.c.b16 %v1183, %v1176
    %v1310 = vpack.c.b16 %v1184, %v1177
    %v1311 = vpack.c.b16 %v1185, %v1178
    %v1312 = vpack.c.b16 %v1186, %v1179
    %v1313 = vpack.c.b16 %v1187, %v1180
    %v1314 = vpack.c.b16 %v1188, %v1181
    %v1315 = vpack.c.b16 %v1196, %v1189
    %v1316 = vpack.c.b16 %v1197, %v1190
    %v1317 = vpack.c.b16 %v1198, %v1191
    %v1318 = vpack.c.b16 %v1199, %v1192
    %v1319 = vpack.c.b16 %v1200, %v1193
    %v1320 = vpack.c.b16 %v1201, %v1194
    %v1321 = vpack.c.b16 %v1202, %v1195
    %v1322 = vpack.c.b16 %v1210, %v1203
    %v1323 = vpack.c.b16 %v1211, %v1204
    %v1324 = vpack.c.b16 %v1212, %v1205
    %v1325 = vpack.c.b16 %v1213, %v1206
    %v1326 = vpack.c.b16 %v1214, %v1207
    %v1327 = vpack.c.b16 %v1215, %v1208
    %v1328 = vpack.c.b16 %v1216, %v1209
    %1441 = vmatprep.subr.bf16.mxu0 %v1218
    %1442 = vmatpush1.bf16.msra.mxu0 %v1217
    %1443 = vmatprep.subr.bf16.mxu0 %v1225
    %1444 = vmatpush1.bf16.msra.mxu0 %v1224
    %1445 = vmatprep.subr.bf16.mxu0 %v1232
    %1446 = vmatpush1.bf16.msra.mxu0 %v1231
    %1447 = vmatprep.subr.bf16.mxu0 %v1239
    %1448 = vmatpush1.bf16.msra.mxu0 %v1238
    %1449 = vmatprep.subr.bf16.mxu0 %v1246
    %1450 = vmatpush1.bf16.msra.mxu0 %v1245
    %1451 = vmatprep.subr.bf16.mxu0 %v1253
    %1452 = vmatpush1.bf16.msra.mxu0 %v1252
    %1453 = vmatprep.subr.bf16.mxu0 %v1260
    %1454 = vmatpush1.bf16.msra.mxu0 %v1259
    %1455 = vmatprep.subr.bf16.mxu0 %v1267
    %1456 = vmatpush1.bf16.msra.mxu0 %v1266
    %1457 = vmatprep.subr.bf16.mxu0 %v1274
    %1458 = vmatpush1.bf16.msra.mxu0 %v1273
    %1459 = vmatprep.subr.bf16.mxu0 %v1281
    %1460 = vmatpush1.bf16.msra.mxu0 %v1280
    %1461 = vmatprep.subr.bf16.mxu0 %v1288
    %1462 = vmatpush1.bf16.msra.mxu0 %v1287
    %1463 = vmatprep.subr.bf16.mxu0 %v1295
    %1464 = vmatpush1.bf16.msra.mxu0 %v1294
    %1465 = vmatprep.subr.bf16.mxu0 %v1302
    %1466 = vmatpush1.bf16.msra.mxu0 %v1301
    %1467 = vmatprep.subr.bf16.mxu0 %v1309
    %1468 = vmatpush1.bf16.msra.mxu0 %v1308
    %1469 = vmatprep.subr.bf16.mxu0 %v1316
    %1470 = vmatpush1.bf16.msra.mxu0 %v1315
    %1471 = vmatprep.subr.bf16.mxu0 %v1323
    %1472 = vmatpush1.bf16.msra.mxu0 %v1322
    %1473 = vmatprep.mubr.bf16.mxu0 %v699
    %1474 = vmatmul.mubr.bf16.gmra.mrb[0].mxu0 %v698
    %v1475 = vpop.f32.mrb[0].mxu0
    %v1476 = vadd.f32 %v833, %v1475
    %v1477 = vpop.f32.mrb[0].mxu0
    %v1478 = vadd.f32 %v837, %v1477
    %v1479 = vpop.f32.mrb[0].mxu0
    %v1480 = vadd.f32 %v833, %v1479
    %v1481 = vpop.f32.mrb[0].mxu0
    %v1482 = vadd.f32 %v837, %v1481
    %1483 = vdwg.mxu0
    %1484 = vmatprep.subr.bf16.mxu0 %v1220
    %1485 = vmatpush1.bf16.msra.mxu0 %v1219
    %1486 = vmatprep.subr.bf16.mxu0 %v1227
    %1487 = vmatpush1.bf16.msra.mxu0 %v1226
    %1488 = vmatprep.subr.bf16.mxu0 %v1234
    %1489 = vmatpush1.bf16.msra.mxu0 %v1233
    %1490 = vmatprep.subr.bf16.mxu0 %v1241
    %1491 = vmatpush1.bf16.msra.mxu0 %v1240
    %1492 = vmatprep.subr.bf16.mxu0 %v1248
    %1493 = vmatpush1.bf16.msra.mxu0 %v1247
    %1494 = vmatprep.subr.bf16.mxu0 %v1255
    %1495 = vmatpush1.bf16.msra.mxu0 %v1254
    %1496 = vmatprep.subr.bf16.mxu0 %v1262
    %1497 = vmatpush1.bf16.msra.mxu0 %v1261
    %1498 = vmatprep.subr.bf16.mxu0 %v1269
    %1499 = vmatpush1.bf16.msra.mxu0 %v1268
    %1500 = vmatprep.subr.bf16.mxu0 %v1276
    %1501 = vmatpush1.bf16.msra.mxu0 %v1275
    %1502 = vmatprep.subr.bf16.mxu0 %v1283
    %1503 = vmatpush1.bf16.msra.mxu0 %v1282
    %1504 = vmatprep.subr.bf16.mxu0 %v1290
    %1505 = vmatpush1.bf16.msra.mxu0 %v1289
    %1506 = vmatprep.subr.bf16.mxu0 %v1297
    %1507 = vmatpush1.bf16.msra.mxu0 %v1296
    %1508 = vmatprep.subr.bf16.mxu0 %v1304
    %1509 = vmatpush1.bf16.msra.mxu0 %v1303
    %1510 = vmatprep.subr.bf16.mxu0 %v1311
    %1511 = vmatpush1.bf16.msra.mxu0 %v1310
    %1512 = vmatprep.subr.bf16.mxu0 %v1318
    %1513 = vmatpush1.bf16.msra.mxu0 %v1317
    %1514 = vmatprep.subr.bf16.mxu0 %v1325
    %1515 = vmatpush1.bf16.msra.mxu0 %v1324
    %1516 = vmatprep.mubr.bf16.mxu0 %v699
    %1517 = vmatmul.mubr.bf16.gmra.mrb[0].mxu0 %v698
    %v1518 = vpop.f32.mrb[0].mxu0
    %v1519 = vadd.f32 %v841, %v1518
    %v1520 = vpop.f32.mrb[0].mxu0
    %v1521 = vadd.f32 %v845, %v1520
    %v1522 = vpop.f32.mrb[0].mxu0
    %v1523 = vadd.f32 %v841, %v1522
    %v1524 = vpop.f32.mrb[0].mxu0
    %v1525 = vadd.f32 %v845, %v1524
    %1526 = vdwg.mxu0
    %1527 = vmatprep.subr.bf16.mxu0 %v1222
    %1528 = vmatpush1.bf16.msra.mxu0 %v1221
    %1529 = vmatprep.subr.bf16.mxu0 %v1229
    %1530 = vmatpush1.bf16.msra.mxu0 %v1228
    %1531 = vmatprep.subr.bf16.mxu0 %v1236
    %1532 = vmatpush1.bf16.msra.mxu0 %v1235
    %1533 = vmatprep.subr.bf16.mxu0 %v1243
    %1534 = vmatpush1.bf16.msra.mxu0 %v1242
    %1535 = vmatprep.subr.bf16.mxu0 %v1250
    %1536 = vmatpush1.bf16.msra.mxu0 %v1249
    %1537 = vmatprep.subr.bf16.mxu0 %v1257
    %1538 = vmatpush1.bf16.msra.mxu0 %v1256
    %1539 = vmatprep.subr.bf16.mxu0 %v1264
    %1540 = vmatpush1.bf16.msra.mxu0 %v1263
    %1541 = vmatprep.subr.bf16.mxu0 %v1271
    %1542 = vmatpush1.bf16.msra.mxu0 %v1270
    %1543 = vmatprep.subr.bf16.mxu0 %v1278
    %1544 = vmatpush1.bf16.msra.mxu0 %v1277
    %1545 = vmatprep.subr.bf16.mxu0 %v1285
    %1546 = vmatpush1.bf16.msra.mxu0 %v1284
    %1547 = vmatprep.subr.bf16.mxu0 %v1292
    %1548 = vmatpush1.bf16.msra.mxu0 %v1291
    %1549 = vmatprep.subr.bf16.mxu0 %v1299
    %1550 = vmatpush1.bf16.msra.mxu0 %v1298
    %1551 = vmatprep.subr.bf16.mxu0 %v1306
    %1552 = vmatpush1.bf16.msra.mxu0 %v1305
    %1553 = vmatprep.subr.bf16.mxu0 %v1313
    %1554 = vmatpush1.bf16.msra.mxu0 %v1312
    %1555 = vmatprep.subr.bf16.mxu0 %v1320
    %1556 = vmatpush1.bf16.msra.mxu0 %v1319
    %1557 = vmatprep.subr.bf16.mxu0 %v1327
    %1558 = vmatpush1.bf16.msra.mxu0 %v1326
    %1559 = vmatprep.mubr.bf16.mxu0 %v699
    %1560 = vmatmul.mubr.bf16.gmra.mrb[0].mxu0 %v698
    %v1561 = vpop.f32.mrb[0].mxu0
    %v1562 = vadd.f32 %v849, %v1561
    %v1563 = vpop.f32.mrb[0].mxu0
    %v1564 = vadd.f32 %v853, %v1563
    %v1565 = vpop.f32.mrb[0].mxu0
    %v1566 = vadd.f32 %v849, %v1565
    %v1567 = vpop.f32.mrb[0].mxu0
    %v1568 = vadd.f32 %v853, %v1567
    %1569 = vdwg.mxu0
    %1570 = vmatprep.subr.bf16.mxu0 0
    %1571 = vmatpush1.bf16.msra.mxu0 %v1223
    %1572 = vmatprep.subr.bf16.mxu0 0
    %1573 = vmatpush1.bf16.msra.mxu0 %v1230
    %1574 = vmatprep.subr.bf16.mxu0 0
    %1575 = vmatpush1.bf16.msra.mxu0 %v1237
    %1576 = vmatprep.subr.bf16.mxu0 0
    %1577 = vmatpush1.bf16.msra.mxu0 %v1244
    %1578 = vmatprep.subr.bf16.mxu0 0
    %1579 = vmatpush1.bf16.msra.mxu0 %v1251
    %1580 = vmatprep.subr.bf16.mxu0 0
    %1581 = vmatpush1.bf16.msra.mxu0 %v1258
    %1582 = vmatprep.subr.bf16.mxu0 0
    %1583 = vmatpush1.bf16.msra.mxu0 %v1265
    %1584 = vmatprep.subr.bf16.mxu0 0
    %1585 = vmatpush1.bf16.msra.mxu0 %v1272
    %1586 = vmatprep.subr.bf16.mxu0 0
    %1587 = vmatpush1.bf16.msra.mxu0 %v1279
    %1588 = vmatprep.subr.bf16.mxu0 0
    %1589 = vmatpush1.bf16.msra.mxu0 %v1286
    %1590 = vmatprep.subr.bf16.mxu0 0
    %1591 = vmatpush1.bf16.msra.mxu0 %v1293
    %1592 = vmatprep.subr.bf16.mxu0 0
    %1593 = vmatpush1.bf16.msra.mxu0 %v1300
    %1594 = vmatprep.subr.bf16.mxu0 0
    %1595 = vmatpush1.bf16.msra.mxu0 %v1307
    %1596 = vmatprep.subr.bf16.mxu0 0
    %1597 = vmatpush1.bf16.msra.mxu0 %v1314
    %1598 = vmatprep.subr.bf16.mxu0 0
    %1599 = vmatpush1.bf16.msra.mxu0 %v1321
    %1600 = vmatprep.subr.bf16.mxu0 0
    %1601 = vmatpush1.bf16.msra.mxu0 %v1328
    %1602 = vmatprep.mubr.bf16.mxu0 %v699
    %1603 = vmatmul.mubr.bf16.gmra.mrb[0].mxu0 %v698
    %v1604 = vpop.f32.mrb[0].mxu0
    %v1605 = vadd.f32 %v857, %v1604
    %v1606 = vpop.f32.mrb[0].mxu0
    %v1607 = vpop.f32.mrb[0].mxu0
    %v1608 = vadd.f32 %v857, %v1607
    %v1609 = vpop.f32.mrb[0].mxu0
    %1610 = vdwg.mxu0
    %v1611 = vmul.f32 %v1476, 0.5
    %v1612 = vmul.f32 %v1478, 0.5
    %v1613 = vmul.f32 %v1519, 0.5
    %v1614 = vmul.f32 %v1521, 0.5
    %v1615 = vmul.f32 %v1562, 0.5
    %v1616 = vmul.f32 %v1564, 0.5
    %v1617 = vmul.f32 %v1605, 0.5
    %v1618 = vmul.f32 %v1480, 0.5
    %v1619 = vmul.f32 %v1482, 0.5
    %v1620 = vmul.f32 %v1523, 0.5
    %v1621 = vmul.f32 %v1525, 0.5
    %v1622 = vmul.f32 %v1566, 0.5
    %v1623 = vmul.f32 %v1568, 0.5
    %v1624 = vmul.f32 %v1608, 0.5
    %v1625 = vtanh.pop %v1611
    %v1626 = vtanh.pop %v1612
    %v1627 = vtanh.pop %v1613
    %v1628 = vtanh.pop %v1614
    %v1629 = vtanh.pop %v1615
    %v1630 = vtanh.pop %v1616
    %v1631 = vtanh.pop %v1617
    %v1632 = vtanh.pop %v1618
    %v1633 = vtanh.pop %v1619
    %v1634 = vtanh.pop %v1620
    %v1635 = vtanh.pop %v1621
    %v1636 = vtanh.pop %v1622
    %v1637 = vtanh.pop %v1623
    %v1638 = vtanh.pop %v1624
    %v1639 = vadd.f32 %v1625, 1.0
    %v1640 = vadd.f32 %v1626, 1.0
    %v1641 = vadd.f32 %v1627, 1.0
    %v1642 = vadd.f32 %v1628, 1.0
    %v1643 = vadd.f32 %v1629, 1.0
    %v1644 = vadd.f32 %v1630, 1.0
    %v1645 = vadd.f32 %v1631, 1.0
    %v1646 = vadd.f32 %v1632, 1.0
    %v1647 = vadd.f32 %v1633, 1.0
    %v1648 = vadd.f32 %v1634, 1.0
    %v1649 = vadd.f32 %v1635, 1.0
    %v1650 = vadd.f32 %v1636, 1.0
    %v1651 = vadd.f32 %v1637, 1.0
    %v1652 = vadd.f32 %v1638, 1.0
    %v1653 = vmul.f32 %v1639, 0.5
    %v1654 = vmul.f32 %v1640, 0.5
    %v1655 = vmul.f32 %v1641, 0.5
    %v1656 = vmul.f32 %v1642, 0.5
    %v1657 = vmul.f32 %v1643, 0.5
    %v1658 = vmul.f32 %v1644, 0.5
    %v1659 = vmul.f32 %v1645, 0.5
    %v1660 = vmul.f32 %v1646, 0.5
    %v1661 = vmul.f32 %v1647, 0.5
    %v1662 = vmul.f32 %v1648, 0.5
    %v1663 = vmul.f32 %v1649, 0.5
    %v1664 = vmul.f32 %v1650, 0.5
    %v1665 = vmul.f32 %v1651, 0.5
    %v1666 = vmul.f32 %v1652, 0.5
    %1667 = vst [vmem:[#allocation2] sm:$0xff] %v1653
    %1668 = vst [vmem:[#allocation2 + $0x8] sm:$0xff] %v1654
    %1669 = vst [vmem:[#allocation2 + $0x10] sm:$0xff] %v1655
    %1670 = vst [vmem:[#allocation2 + $0x18] sm:$0xff] %v1656
    %1671 = vst [vmem:[#allocation2 + $0x20] sm:$0xff] %v1657
    %1672 = vst [vmem:[#allocation2 + $0x28] sm:$0xff] %v1658
    %vm1673 = vcmask 130048
    %1674 = vst.msk [vmem:[#allocation2 + $0x30] sm:$0xff] %vm1673, %v1659
    %1675 = vst [vmem:[#allocation2 + $0x38] sm:$0xff] %v1660
    %1676 = vst [vmem:[#allocation2 + $0x40] sm:$0xff] %v1661
    %1677 = vst [vmem:[#allocation2 + $0x48] sm:$0xff] %v1662
    %1678 = vst [vmem:[#allocation2 + $0x50] sm:$0xff] %v1663
    %1679 = vst [vmem:[#allocation2 + $0x58] sm:$0xff] %v1664
    %1680 = vst [vmem:[#allocation2 + $0x60] sm:$0xff] %v1665
    %1681 = vst.msk [vmem:[#allocation2 + $0x68] sm:$0xff] %vm1673, %v1666
    // Predicated region
    $region38: #{tpu_custom_call.1} parent=1 // pred_check
      _
    $region39: #{tpu_custom_call.1} parent=1 // pred_check_branch
      %1683 = sbr.rel (0) target = $region41
    $region40: #{tpu_custom_call.1} parent=1 // pred_region
      %s1685 = ssub.s32 1792, 1792
      %1686 = vsyncadd [#allocation3], %s1685
      %s1687 = sshll.u32 [#allocation2], 4
      %s1688 = int_to_ptr.vmem [resolvable:$true] %s1687
      %1693 = dma.vmem_to_hbm [thread:$0]  %s1688, 1792, %s9, [#allocation3], 896, 896, 56
    $region41: #{tpu_custom_call.1} parent=1 // pred_fallthru
      _
    // Predicated region
    $region42: #{tpu_custom_call.1} parent=1 // pred_check
      _
    $region43: #{tpu_custom_call.1} parent=1 // pred_check_branch
      %1695 = sbr.rel (0) target = $region45
    $region44: #{tpu_custom_call.1} parent=1 // pred_region
      %1696 = dma.done [#allocation3], 1792
    $region45: #{tpu_custom_call.1} parent=1 // pred_fallthru
      _
    %1697 = vsyncpa [#allocation3], 1

</llo_original>
